<compile_context>
chip_gen: v7x
topology: tpu7x:2x2x1
jax: 0.10.0
libtpu: 0.0.40
codegen_flags: <defaults>
</compile_context>

<pallas_src>
import functools

import jax
import jax.numpy as jnp
from jax.experimental import pallas as pl
from jax.experimental.pallas import tpu as pltpu


def _layer_norm(x, gamma, beta, eps=1e-5):
    # x: (T, D) f32, gamma/beta: (1, D) f32 -- statistics kept in f32.
    mu = jnp.mean(x, axis=-1, keepdims=True)
    var = jnp.mean((x - mu) ** 2, axis=-1, keepdims=True)
    return (x - mu) * jax.lax.rsqrt(var + eps) * gamma + beta


def _gelu(x):
    # tanh-approximate GELU (GPT-2 "new gelu")
    c = 0.7978845608028654  # sqrt(2/pi)
    return 0.5 * x * (1.0 + jnp.tanh(c * (x + 0.044715 * x * x * x)))


def decoder_block_kernel(x_ref,
                         wqkv_ref, bqkv_ref,
                         wo_ref, bo_ref,
                         w1_ref, b1_ref, w2_ref, b2_ref,
                         ln1_g_ref, ln1_b_ref, ln2_g_ref, ln2_b_ref,
                         out_ref,
                         attn_scratch,
                         *, n_heads, with_residuals):
    x = x_ref[...].astype(jnp.float32)          # (T, D), leading dim squeezed
    T, D = x.shape
    hd = D // n_heads
    scale = 1.0 / (hd ** 0.5)

    # ---- LayerNorm 1 (f32) ----
    xn = _layer_norm(x, ln1_g_ref[...], ln1_b_ref[...])

    # ---- Fused QKV projection: one bf16 MXU pass with N = 3D ----
    qkv = jnp.dot(xn.astype(jnp.bfloat16), wqkv_ref[...],
                  preferred_element_type=jnp.float32) + bqkv_ref[...]
    q = qkv[:, :D]
    k = qkv[:, D:2 * D]
    v = qkv[:, 2 * D:]

    row = jax.lax.broadcasted_iota(jnp.int32, (T, T), 0)
    col = jax.lax.broadcasted_iota(jnp.int32, (T, T), 1)
    causal = col <= row

    # ---- Causal multi-head attention; heads written into VMEM scratch ----
    for h in range(n_heads):                    # static unrolled loop over heads
        sl = slice(h * hd, (h + 1) * hd)
        qh = (q[:, sl] * scale).astype(jnp.bfloat16)   # scale on (T,hd), not (T,T)
        kh = k[:, sl].astype(jnp.bfloat16)
        vh = v[:, sl].astype(jnp.bfloat16)
        s = jnp.dot(qh, kh.T, preferred_element_type=jnp.float32)   # (T, T) f32
        s = jnp.where(causal, s, -jnp.inf)      # diagonal always unmasked -> safe
        s = s - jnp.max(s, axis=-1, keepdims=True)
        p = jnp.exp(s)
        p = p * pl.reciprocal(jnp.sum(p, axis=-1, keepdims=True), approx=True)
        attn_scratch[:, sl] = jnp.dot(p.astype(jnp.bfloat16), vh,
                                      preferred_element_type=jnp.float32)

    attn_out = jnp.dot(attn_scratch[...].astype(jnp.bfloat16), wo_ref[...],
                       preferred_element_type=jnp.float32) + bo_ref[...]
    # Dropout(p=0.0) == identity.

    if with_residuals:
        x = attn_out + x
    else:
        x = attn_out

    # ---- LayerNorm 2 (f32) ----
    xn2 = _layer_norm(x, ln2_g_ref[...], ln2_b_ref[...])

    # ---- MLP (bf16 matmuls, f32 accumulation / GELU) ----
    h1 = jnp.dot(xn2.astype(jnp.bfloat16), w1_ref[...],
                 preferred_element_type=jnp.float32) + b1_ref[...]
    h1 = _gelu(h1)
    mlp_out = jnp.dot(h1.astype(jnp.bfloat16), w2_ref[...],
                      preferred_element_type=jnp.float32) + b2_ref[...]

    if with_residuals:
        y = mlp_out + x
    else:
        y = mlp_out

    out_ref[...] = y.astype(out_ref.dtype)


def transformer_decoder_block(x, params, *, n_heads, with_residuals=True,
                              compute_dtype=jnp.bfloat16):
    """x: (B, T, D) float32. params: dict of f32 2-D arrays (biases (1, N))."""
    B, T, D = x.shape
    H = params["w1"].shape[1]

    # ---- host-side weight prep: fuse QKV, cast matmul weights to bf16 ----
    # TODO(synk): a real PyTorch fused-QKV Linear stores (3D, D) (out, in)
    # weights; transpose/split accordingly when importing checkpoints.
    w_qkv = jnp.concatenate([params["wq"], params["wk"], params["wv"]],
                            axis=1).astype(compute_dtype)          # (D, 3D)
    b_qkv = jnp.concatenate([params["bq"], params["bk"], params["bv"]],
                            axis=1).astype(jnp.float32)            # (1, 3D)
    param_arrays = [
        w_qkv, b_qkv,
        params["wo"].astype(compute_dtype), params["bo"].astype(jnp.float32),
        params["w1"].astype(compute_dtype), params["b1"].astype(jnp.float32),
        params["w2"].astype(compute_dtype), params["b2"].astype(jnp.float32),
        params["ln1_g"].astype(jnp.float32), params["ln1_b"].astype(jnp.float32),
        params["ln2_g"].astype(jnp.float32), params["ln2_b"].astype(jnp.float32),
    ]

    x_spec = pl.BlockSpec((pl.Squeezed(), T, D), lambda b: (b, 0, 0))
    out_spec = pl.BlockSpec((pl.Squeezed(), T, D), lambda b: (b, 0, 0))
    # Weights never change across the grid -> single-buffered (no double copy).
    param_specs = [
        pl.BlockSpec(p.shape, lambda b: (0, 0), pipeline_mode=pl.Buffered(1))
        for p in param_arrays
    ]

    # VMEM budget sized to actual residency (single-buffered weights +
    # (T,D)/(T,3D)/(T,H)/(T,T) f32 activations) with headroom, never below the
    # default and capped under physical VMEM.
    weight_bytes = sum(int(p.size) * p.dtype.itemsize for p in param_arrays)
    act_bytes = 4 * (8 * T * D + 3 * T * D + T * H + T * T)
    vmem_limit = max(32 << 20,
                     min(2 * weight_bytes + 4 * act_bytes + (4 << 20), 100 << 20))

    kernel = functools.partial(decoder_block_kernel,
                               n_heads=n_heads,
                               with_residuals=with_residuals)

    return pl.pallas_call(
        kernel,
        out_shape=jax.ShapeDtypeStruct((B, T, D), x.dtype),
        grid_spec=pltpu.PrefetchScalarGridSpec(
            num_scalar_prefetch=0,
            grid=(B,),
            in_specs=[x_spec] + param_specs,
            out_specs=out_spec,
            scratch_shapes=[pltpu.VMEM((T, D), jnp.float32)],
        ),
        compiler_params=pltpu.CompilerParams(
            dimension_semantics=("parallel",),
            vmem_limit_bytes=int(vmem_limit)),
    )(x, *param_arrays)


def reference_decoder_block(x, params, *, n_heads, with_residuals=True):
    """Pure-JAX f32 reference with identical semantics, for validation."""
    def ln(v, g, b):
        mu = jnp.mean(v, axis=-1, keepdims=True)
        var = jnp.mean((v - mu) ** 2, axis=-1, keepdims=True)
        return (v - mu) * jax.lax.rsqrt(var + 1e-5) * g + b

    B, T, D = x.shape
    hd = D // n_heads

    def attn(v):
        q = v @ params["wq"] + params["bq"]
        k = v @ params["wk"] + params["bk"]
        vv = v @ params["wv"] + params["bv"]
        def split(a):
            return a.reshape(B, T, n_heads, hd).transpose(0, 2, 1, 3)
        q, k, vv = split(q), split(k), split(vv)
        s = jnp.einsum("bhqd,bhkd->bhqk", q, k) / (hd ** 0.5)
        mask = jnp.tril(jnp.ones((T, T), bool))
        s = jnp.where(mask, s, -jnp.inf)
        p = jax.nn.softmax(s, axis=-1)
        o = jnp.einsum("bhqk,bhkd->bhqd", p, vv)
        o = o.transpose(0, 2, 1, 3).reshape(B, T, D)
        return o @ params["wo"] + params["bo"]

    def mlp(v):
        h = v @ params["w1"] + params["b1"]
        c = 0.7978845608028654
        h = 0.5 * h * (1.0 + jnp.tanh(c * (h + 0.044715 * h ** 3)))
        return h @ params["w2"] + params["b2"]

    if with_residuals:
        res = x
        h = attn(ln(res, params["ln1_g"], params["ln1_b"])) + res
        return mlp(ln(h, params["ln2_g"], params["ln2_b"])) + h
    else:
        h = attn(ln(x, params["ln1_g"], params["ln1_b"]))
        return mlp(ln(h, params["ln2_g"], params["ln2_b"]))


def make_params(key, embed_size, mlp_hidden_size):
    ks = jax.random.split(key, 12)
    D, H = embed_size, mlp_hidden_size
    s = 0.02
    return {
        "wq": s * jax.random.normal(ks[0], (D, D), jnp.float32),
        "wk": s * jax.random.normal(ks[1], (D, D), jnp.float32),
        "wv": s * jax.random.normal(ks[2], (D, D), jnp.float32),
        "bq": s * jax.random.normal(ks[3], (1, D), jnp.float32),
        "bk": s * jax.random.normal(ks[4], (1, D), jnp.float32),
        "bv": s * jax.random.normal(ks[5], (1, D), jnp.float32),
        "wo": s * jax.random.normal(ks[6], (D, D), jnp.float32),
        "bo": s * jax.random.normal(ks[7], (1, D), jnp.float32),
        "w1": s * jax.random.normal(ks[8], (D, H), jnp.float32),
        "b1": s * jax.random.normal(ks[9], (1, H), jnp.float32),
        "w2": s * jax.random.normal(ks[10], (H, D), jnp.float32),
        "b2": s * jax.random.normal(ks[11], (1, D), jnp.float32),
        # nn.LayerNorm default init (ones / zeros)
        "ln1_g": jnp.ones((1, D), jnp.float32),
        "ln1_b": jnp.zeros((1, D), jnp.float32),
        "ln2_g": jnp.ones((1, D), jnp.float32),
        "ln2_b": jnp.zeros((1, D), jnp.float32),
    }


if __name__ == "__main__":
    B, T = 2, 8           # batch, sequence length (<= max_context_len)
    n_heads = 4
    embed_size = 32       # NOTE: realistic models should keep D a multiple of 128
    mlp_hidden = 64

    key = jax.random.PRNGKey(0)
    kx, kp = jax.random.split(key)
    x = jax.random.normal(kx, (B, T, embed_size), jnp.float32)
    params = make_params(kp, embed_size, mlp_hidden)

    for with_residuals in (True, False):
        out = transformer_decoder_block(x, params, n_heads=n_heads,
                                        with_residuals=with_residuals)
        out = jax.block_until_ready(out)
        ref = reference_decoder_block(x, params, n_heads=n_heads,
                                      with_residuals=with_residuals)
        assert out.shape == (B, T, embed_size)
        # bf16 matmul inputs (f32 accumulation) -> compare vs f32 reference
        # with bf16-appropriate tolerance.
        assert jnp.allclose(out, ref, atol=2e-2, rtol=2e-2), \
            f"mismatch vs JAX reference (with_residuals={with_residuals})"

    print("KERNEL_OK")
</pallas_src>

<mosaic_0001>
module attributes {stable_mosaic.version = 11 : i64} {
  func.func @decoder_block_kernel(%arg0: i32, %arg1: memref<1x8x32xf32, #tpu.memory_space<vmem>>, %arg2: memref<32x96xbf16, #tpu.memory_space<vmem>>, %arg3: memref<1x96xf32, #tpu.memory_space<vmem>>, %arg4: memref<32x32xbf16, #tpu.memory_space<vmem>>, %arg5: memref<1x32xf32, #tpu.memory_space<vmem>>, %arg6: memref<32x64xbf16, #tpu.memory_space<vmem>>, %arg7: memref<1x64xf32, #tpu.memory_space<vmem>>, %arg8: memref<64x32xbf16, #tpu.memory_space<vmem>>, %arg9: memref<1x32xf32, #tpu.memory_space<vmem>>, %arg10: memref<1x32xf32, #tpu.memory_space<vmem>>, %arg11: memref<1x32xf32, #tpu.memory_space<vmem>>, %arg12: memref<1x32xf32, #tpu.memory_space<vmem>>, %arg13: memref<1x32xf32, #tpu.memory_space<vmem>>, %arg14: memref<1x8x32xf32, #tpu.memory_space<vmem>>, %arg15: memref<8x32xf32, #tpu.memory_space<vmem>>) attributes {dimension_semantics = [#tpu.dimension_semantics<parallel>], iteration_bounds = array<i64: 2>, scalar_prefetch = 0 : i64, scratch_operands = 1 : i64, tpu.core_type = #tpu.core_type<tc>, window_params = [{transform_indices = @transform_0, window_bounds = array<i64: 1, 8, 32>}, {pipeline_mode = #tpu.pipeline_mode<synchronous>, transform_indices = @transform_1, window_bounds = array<i64: 32, 96>}, {pipeline_mode = #tpu.pipeline_mode<synchronous>, transform_indices = @transform_2, window_bounds = array<i64: 1, 96>}, {pipeline_mode = #tpu.pipeline_mode<synchronous>, transform_indices = @transform_3, window_bounds = array<i64: 32, 32>}, {pipeline_mode = #tpu.pipeline_mode<synchronous>, transform_indices = @transform_4, window_bounds = array<i64: 1, 32>}, {pipeline_mode = #tpu.pipeline_mode<synchronous>, transform_indices = @transform_5, window_bounds = array<i64: 32, 64>}, {pipeline_mode = #tpu.pipeline_mode<synchronous>, transform_indices = @transform_6, window_bounds = array<i64: 1, 64>}, {pipeline_mode = #tpu.pipeline_mode<synchronous>, transform_indices = @transform_7, window_bounds = array<i64: 64, 32>}, {pipeline_mode = #tpu.pipeline_mode<synchronous>, transform_indices = @transform_8, window_bounds = array<i64: 1, 32>}, {pipeline_mode = #tpu.pipeline_mode<synchronous>, transform_indices = @transform_9, window_bounds = array<i64: 1, 32>}, {pipeline_mode = #tpu.pipeline_mode<synchronous>, transform_indices = @transform_10, window_bounds = array<i64: 1, 32>}, {pipeline_mode = #tpu.pipeline_mode<synchronous>, transform_indices = @transform_11, window_bounds = array<i64: 1, 32>}, {pipeline_mode = #tpu.pipeline_mode<synchronous>, transform_indices = @transform_12, window_bounds = array<i64: 1, 32>}, {transform_indices = @transform_13, window_bounds = array<i64: 1, 8, 32>}]} {
    %c0 = arith.constant 0 : index
    %c0_0 = arith.constant 0 : index
    %c0_1 = arith.constant 0 : index
    %0 = vector.load %arg1[%c0, %c0_0, %c0_1] : memref<1x8x32xf32, #tpu.memory_space<vmem>>, vector<1x8x32xf32>
    %1 = vector.shape_cast %0 : vector<1x8x32xf32> to vector<8x32xf32>
    %c0_2 = arith.constant 0 : index
    %c0_3 = arith.constant 0 : index
    %2 = vector.load %arg10[%c0_2, %c0_3] : memref<1x32xf32, #tpu.memory_space<vmem>>, vector<1x32xf32>
    %c0_4 = arith.constant 0 : index
    %c0_5 = arith.constant 0 : index
    %3 = vector.load %arg11[%c0_4, %c0_5] : memref<1x32xf32, #tpu.memory_space<vmem>>, vector<1x32xf32>
    %cst = arith.constant dense<0.000000e+00> : vector<8xf32>
    %4 = vector.multi_reduction <add>, %1, %cst [1] : vector<8x32xf32> to vector<8xf32>
    %5 = vector.shape_cast %4 : vector<8xf32> to vector<8x1xf32>
    %cst_6 = arith.constant 3.200000e+01 : f32
    %6 = vector.broadcast %cst_6 : f32 to vector<8x1xf32>
    %7 = arith.divf %5, %6 : vector<8x1xf32>
    %8 = vector.broadcast %7 : vector<8x1xf32> to vector<8x32xf32>
    %9 = arith.subf %1, %8 : vector<8x32xf32>
    %10 = arith.mulf %9, %9 : vector<8x32xf32>
    %cst_7 = arith.constant dense<0.000000e+00> : vector<8xf32>
    %11 = vector.multi_reduction <add>, %10, %cst_7 [1] : vector<8x32xf32> to vector<8xf32>
    %12 = vector.shape_cast %11 : vector<8xf32> to vector<8x1xf32>
    %cst_8 = arith.constant 3.200000e+01 : f32
    %13 = vector.broadcast %cst_8 : f32 to vector<8x1xf32>
    %14 = arith.divf %12, %13 : vector<8x1xf32>
    %15 = vector.broadcast %7 : vector<8x1xf32> to vector<8x32xf32>
    %16 = arith.subf %1, %15 : vector<8x32xf32>
    %cst_9 = arith.constant 9.99999974E-6 : f32
    %17 = vector.broadcast %cst_9 : f32 to vector<8x1xf32>
    %18 = arith.addf %14, %17 : vector<8x1xf32>
    %19 = math.rsqrt %18 : vector<8x1xf32>
    %20 = vector.broadcast %19 : vector<8x1xf32> to vector<8x32xf32>
    %21 = arith.mulf %16, %20 : vector<8x32xf32>
    %22 = vector.broadcast %2 : vector<1x32xf32> to vector<8x32xf32>
    %23 = arith.mulf %21, %22 : vector<8x32xf32>
    %24 = vector.broadcast %3 : vector<1x32xf32> to vector<8x32xf32>
    %25 = arith.addf %23, %24 : vector<8x32xf32>
    %26 = arith.truncf %25 : vector<8x32xf32> to vector<8x32xbf16>
    %c0_10 = arith.constant 0 : index
    %c0_11 = arith.constant 0 : index
    %27 = vector.load %arg2[%c0_10, %c0_11] : memref<32x96xbf16, #tpu.memory_space<vmem>>, vector<32x96xbf16>
    %cst_12 = arith.constant dense<0.000000e+00> : vector<8x96xf32>
    %28 = tpu.matmul %26, %27, %cst_12 {dimension_numbers = #tpu.dot_dimension_numbers<[1], [0], [0], [1], [0, 0, 1, 1], [], []>} : vector<8x32xbf16>, vector<32x96xbf16>, vector<8x96xf32> -> vector<8x96xf32>
    %c0_13 = arith.constant 0 : index
    %c0_14 = arith.constant 0 : index
    %29 = vector.load %arg3[%c0_13, %c0_14] : memref<1x96xf32, #tpu.memory_space<vmem>>, vector<1x96xf32>
    %30 = vector.broadcast %29 : vector<1x96xf32> to vector<8x96xf32>
    %31 = arith.addf %28, %30 : vector<8x96xf32>
    %32 = vector.extract_strided_slice %31 {offsets = [0, 0], sizes = [8, 32], strides = [1, 1]} : vector<8x96xf32> to vector<8x32xf32>
    %33 = vector.extract_strided_slice %31 {offsets = [0, 32], sizes = [8, 32], strides = [1, 1]} : vector<8x96xf32> to vector<8x32xf32>
    %34 = vector.extract_strided_slice %31 {offsets = [0, 64], sizes = [8, 32], strides = [1, 1]} : vector<8x96xf32> to vector<8x32xf32>
    %35 = tpu.iota {dimensions = array<i32: 0>} : vector<8x8xi32>
    %36 = tpu.iota {dimensions = array<i32: 1>} : vector<8x8xi32>
    %37 = arith.cmpi sle, %36, %35 : vector<8x8xi32>
    %38 = vector.extract_strided_slice %32 {offsets = [0, 0], sizes = [8, 8], strides = [1, 1]} : vector<8x32xf32> to vector<8x8xf32>
    %cst_15 = arith.constant 0.353553385 : f32
    %39 = vector.broadcast %cst_15 : f32 to vector<8x8xf32>
    %40 = arith.mulf %38, %39 : vector<8x8xf32>
    %41 = arith.truncf %40 : vector<8x8xf32> to vector<8x8xbf16>
    %42 = vector.extract_strided_slice %33 {offsets = [0, 0], sizes = [8, 8], strides = [1, 1]} : vector<8x32xf32> to vector<8x8xf32>
    %43 = arith.truncf %42 : vector<8x8xf32> to vector<8x8xbf16>
    %44 = vector.extract_strided_slice %34 {offsets = [0, 0], sizes = [8, 8], strides = [1, 1]} : vector<8x32xf32> to vector<8x8xf32>
    %45 = arith.truncf %44 : vector<8x8xf32> to vector<8x8xbf16>
    %46 = tpu.transpose %43, [1, 0] : vector<8x8xbf16> -> vector<8x8xbf16>
    %cst_16 = arith.constant dense<0.000000e+00> : vector<8x8xf32>
    %47 = tpu.matmul %41, %46, %cst_16 {dimension_numbers = #tpu.dot_dimension_numbers<[1], [0], [0], [1], [0, 0, 1, 1], [], []>} : vector<8x8xbf16>, vector<8x8xbf16>, vector<8x8xf32> -> vector<8x8xf32>
    %cst_17 = arith.constant 0xFF800000 : f32
    %48 = vector.broadcast %cst_17 : f32 to vector<8x8xf32>
    %49 = arith.select %37, %47, %48 : vector<8x8xi1>, vector<8x8xf32>
    %cst_18 = arith.constant dense<0xFF800000> : vector<8xf32>
    %50 = vector.multi_reduction <maximumf>, %49, %cst_18 [1] : vector<8x8xf32> to vector<8xf32>
    %51 = vector.shape_cast %50 : vector<8xf32> to vector<8x1xf32>
    %52 = vector.broadcast %51 : vector<8x1xf32> to vector<8x8xf32>
    %53 = arith.subf %49, %52 : vector<8x8xf32>
    %54 = math.exp %53 : vector<8x8xf32>
    %cst_19 = arith.constant dense<0.000000e+00> : vector<8xf32>
    %55 = vector.multi_reduction <add>, %54, %cst_19 [1] : vector<8x8xf32> to vector<8xf32>
    %56 = vector.shape_cast %55 : vector<8xf32> to vector<8x1xf32>
    %57 = tpu.reciprocal %56 {approx = true} : vector<8x1xf32> -> vector<8x1xf32>
    %58 = vector.broadcast %57 : vector<8x1xf32> to vector<8x8xf32>
    %59 = arith.mulf %54, %58 : vector<8x8xf32>
    %60 = arith.truncf %59 : vector<8x8xf32> to vector<8x8xbf16>
    %cst_20 = arith.constant dense<0.000000e+00> : vector<8x8xf32>
    %61 = tpu.matmul %60, %45, %cst_20 {dimension_numbers = #tpu.dot_dimension_numbers<[1], [0], [0], [1], [0, 0, 1, 1], [], []>} : vector<8x8xbf16>, vector<8x8xbf16>, vector<8x8xf32> -> vector<8x8xf32>
    %c0_21 = arith.constant 0 : index
    %c0_22 = arith.constant 0 : index
    %62 = vector.load %arg15[%c0_21, %c0_22] : memref<8x32xf32, #tpu.memory_space<vmem>>, vector<8x8xf32>
    tpu.vector_store %arg15[%c0_21, %c0_22], %61 {strides = array<i32>} : memref<8x32xf32, #tpu.memory_space<vmem>>, vector<8x8xf32>,
    %63 = vector.extract_strided_slice %32 {offsets = [0, 8], sizes = [8, 8], strides = [1, 1]} : vector<8x32xf32> to vector<8x8xf32>
    %cst_23 = arith.constant 0.353553385 : f32
    %64 = vector.broadcast %cst_23 : f32 to vector<8x8xf32>
    %65 = arith.mulf %63, %64 : vector<8x8xf32>
    %66 = arith.truncf %65 : vector<8x8xf32> to vector<8x8xbf16>
    %67 = vector.extract_strided_slice %33 {offsets = [0, 8], sizes = [8, 8], strides = [1, 1]} : vector<8x32xf32> to vector<8x8xf32>
    %68 = arith.truncf %67 : vector<8x8xf32> to vector<8x8xbf16>
    %69 = vector.extract_strided_slice %34 {offsets = [0, 8], sizes = [8, 8], strides = [1, 1]} : vector<8x32xf32> to vector<8x8xf32>
    %70 = arith.truncf %69 : vector<8x8xf32> to vector<8x8xbf16>
    %71 = tpu.transpose %68, [1, 0] : vector<8x8xbf16> -> vector<8x8xbf16>
    %cst_24 = arith.constant dense<0.000000e+00> : vector<8x8xf32>
    %72 = tpu.matmul %66, %71, %cst_24 {dimension_numbers = #tpu.dot_dimension_numbers<[1], [0], [0], [1], [0, 0, 1, 1], [], []>} : vector<8x8xbf16>, vector<8x8xbf16>, vector<8x8xf32> -> vector<8x8xf32>
    %cst_25 = arith.constant 0xFF800000 : f32
    %73 = vector.broadcast %cst_25 : f32 to vector<8x8xf32>
    %74 = arith.select %37, %72, %73 : vector<8x8xi1>, vector<8x8xf32>
    %cst_26 = arith.constant dense<0xFF800000> : vector<8xf32>
    %75 = vector.multi_reduction <maximumf>, %74, %cst_26 [1] : vector<8x8xf32> to vector<8xf32>
    %76 = vector.shape_cast %75 : vector<8xf32> to vector<8x1xf32>
    %77 = vector.broadcast %76 : vector<8x1xf32> to vector<8x8xf32>
    %78 = arith.subf %74, %77 : vector<8x8xf32>
    %79 = math.exp %78 : vector<8x8xf32>
    %cst_27 = arith.constant dense<0.000000e+00> : vector<8xf32>
    %80 = vector.multi_reduction <add>, %79, %cst_27 [1] : vector<8x8xf32> to vector<8xf32>
    %81 = vector.shape_cast %80 : vector<8xf32> to vector<8x1xf32>
    %82 = tpu.reciprocal %81 {approx = true} : vector<8x1xf32> -> vector<8x1xf32>
    %83 = vector.broadcast %82 : vector<8x1xf32> to vector<8x8xf32>
    %84 = arith.mulf %79, %83 : vector<8x8xf32>
    %85 = arith.truncf %84 : vector<8x8xf32> to vector<8x8xbf16>
    %cst_28 = arith.constant dense<0.000000e+00> : vector<8x8xf32>
    %86 = tpu.matmul %85, %70, %cst_28 {dimension_numbers = #tpu.dot_dimension_numbers<[1], [0], [0], [1], [0, 0, 1, 1], [], []>} : vector<8x8xbf16>, vector<8x8xbf16>, vector<8x8xf32> -> vector<8x8xf32>
    %c0_29 = arith.constant 0 : index
    %c8 = arith.constant 8 : index
    %87 = vector.load %arg15[%c0_29, %c8] : memref<8x32xf32, #tpu.memory_space<vmem>>, vector<8x8xf32>
    tpu.vector_store %arg15[%c0_29, %c8], %86 {strides = array<i32>} : memref<8x32xf32, #tpu.memory_space<vmem>>, vector<8x8xf32>,
    %88 = vector.extract_strided_slice %32 {offsets = [0, 16], sizes = [8, 8], strides = [1, 1]} : vector<8x32xf32> to vector<8x8xf32>
    %cst_30 = arith.constant 0.353553385 : f32
    %89 = vector.broadcast %cst_30 : f32 to vector<8x8xf32>
    %90 = arith.mulf %88, %89 : vector<8x8xf32>
    %91 = arith.truncf %90 : vector<8x8xf32> to vector<8x8xbf16>
    %92 = vector.extract_strided_slice %33 {offsets = [0, 16], sizes = [8, 8], strides = [1, 1]} : vector<8x32xf32> to vector<8x8xf32>
    %93 = arith.truncf %92 : vector<8x8xf32> to vector<8x8xbf16>
    %94 = vector.extract_strided_slice %34 {offsets = [0, 16], sizes = [8, 8], strides = [1, 1]} : vector<8x32xf32> to vector<8x8xf32>
    %95 = arith.truncf %94 : vector<8x8xf32> to vector<8x8xbf16>
    %96 = tpu.transpose %93, [1, 0] : vector<8x8xbf16> -> vector<8x8xbf16>
    %cst_31 = arith.constant dense<0.000000e+00> : vector<8x8xf32>
    %97 = tpu.matmul %91, %96, %cst_31 {dimension_numbers = #tpu.dot_dimension_numbers<[1], [0], [0], [1], [0, 0, 1, 1], [], []>} : vector<8x8xbf16>, vector<8x8xbf16>, vector<8x8xf32> -> vector<8x8xf32>
    %cst_32 = arith.constant 0xFF800000 : f32
    %98 = vector.broadcast %cst_32 : f32 to vector<8x8xf32>
    %99 = arith.select %37, %97, %98 : vector<8x8xi1>, vector<8x8xf32>
    %cst_33 = arith.constant dense<0xFF800000> : vector<8xf32>
    %100 = vector.multi_reduction <maximumf>, %99, %cst_33 [1] : vector<8x8xf32> to vector<8xf32>
    %101 = vector.shape_cast %100 : vector<8xf32> to vector<8x1xf32>
    %102 = vector.broadcast %101 : vector<8x1xf32> to vector<8x8xf32>
    %103 = arith.subf %99, %102 : vector<8x8xf32>
    %104 = math.exp %103 : vector<8x8xf32>
    %cst_34 = arith.constant dense<0.000000e+00> : vector<8xf32>
    %105 = vector.multi_reduction <add>, %104, %cst_34 [1] : vector<8x8xf32> to vector<8xf32>
    %106 = vector.shape_cast %105 : vector<8xf32> to vector<8x1xf32>
    %107 = tpu.reciprocal %106 {approx = true} : vector<8x1xf32> -> vector<8x1xf32>
    %108 = vector.broadcast %107 : vector<8x1xf32> to vector<8x8xf32>
    %109 = arith.mulf %104, %108 : vector<8x8xf32>
    %110 = arith.truncf %109 : vector<8x8xf32> to vector<8x8xbf16>
    %cst_35 = arith.constant dense<0.000000e+00> : vector<8x8xf32>
    %111 = tpu.matmul %110, %95, %cst_35 {dimension_numbers = #tpu.dot_dimension_numbers<[1], [0], [0], [1], [0, 0, 1, 1], [], []>} : vector<8x8xbf16>, vector<8x8xbf16>, vector<8x8xf32> -> vector<8x8xf32>
    %c0_36 = arith.constant 0 : index
    %c16 = arith.constant 16 : index
    %112 = vector.load %arg15[%c0_36, %c16] : memref<8x32xf32, #tpu.memory_space<vmem>>, vector<8x8xf32>
    tpu.vector_store %arg15[%c0_36, %c16], %111 {strides = array<i32>} : memref<8x32xf32, #tpu.memory_space<vmem>>, vector<8x8xf32>,
    %113 = vector.extract_strided_slice %32 {offsets = [0, 24], sizes = [8, 8], strides = [1, 1]} : vector<8x32xf32> to vector<8x8xf32>
    %cst_37 = arith.constant 0.353553385 : f32
    %114 = vector.broadcast %cst_37 : f32 to vector<8x8xf32>
    %115 = arith.mulf %113, %114 : vector<8x8xf32>
    %116 = arith.truncf %115 : vector<8x8xf32> to vector<8x8xbf16>
    %117 = vector.extract_strided_slice %33 {offsets = [0, 24], sizes = [8, 8], strides = [1, 1]} : vector<8x32xf32> to vector<8x8xf32>
    %118 = arith.truncf %117 : vector<8x8xf32> to vector<8x8xbf16>
    %119 = vector.extract_strided_slice %34 {offsets = [0, 24], sizes = [8, 8], strides = [1, 1]} : vector<8x32xf32> to vector<8x8xf32>
    %120 = arith.truncf %119 : vector<8x8xf32> to vector<8x8xbf16>
    %121 = tpu.transpose %118, [1, 0] : vector<8x8xbf16> -> vector<8x8xbf16>
    %cst_38 = arith.constant dense<0.000000e+00> : vector<8x8xf32>
    %122 = tpu.matmul %116, %121, %cst_38 {dimension_numbers = #tpu.dot_dimension_numbers<[1], [0], [0], [1], [0, 0, 1, 1], [], []>} : vector<8x8xbf16>, vector<8x8xbf16>, vector<8x8xf32> -> vector<8x8xf32>
    %cst_39 = arith.constant 0xFF800000 : f32
    %123 = vector.broadcast %cst_39 : f32 to vector<8x8xf32>
    %124 = arith.select %37, %122, %123 : vector<8x8xi1>, vector<8x8xf32>
    %cst_40 = arith.constant dense<0xFF800000> : vector<8xf32>
    %125 = vector.multi_reduction <maximumf>, %124, %cst_40 [1] : vector<8x8xf32> to vector<8xf32>
    %126 = vector.shape_cast %125 : vector<8xf32> to vector<8x1xf32>
    %127 = vector.broadcast %126 : vector<8x1xf32> to vector<8x8xf32>
    %128 = arith.subf %124, %127 : vector<8x8xf32>
    %129 = math.exp %128 : vector<8x8xf32>
    %cst_41 = arith.constant dense<0.000000e+00> : vector<8xf32>
    %130 = vector.multi_reduction <add>, %129, %cst_41 [1] : vector<8x8xf32> to vector<8xf32>
    %131 = vector.shape_cast %130 : vector<8xf32> to vector<8x1xf32>
    %132 = tpu.reciprocal %131 {approx = true} : vector<8x1xf32> -> vector<8x1xf32>
    %133 = vector.broadcast %132 : vector<8x1xf32> to vector<8x8xf32>
    %134 = arith.mulf %129, %133 : vector<8x8xf32>
    %135 = arith.truncf %134 : vector<8x8xf32> to vector<8x8xbf16>
    %cst_42 = arith.constant dense<0.000000e+00> : vector<8x8xf32>
    %136 = tpu.matmul %135, %120, %cst_42 {dimension_numbers = #tpu.dot_dimension_numbers<[1], [0], [0], [1], [0, 0, 1, 1], [], []>} : vector<8x8xbf16>, vector<8x8xbf16>, vector<8x8xf32> -> vector<8x8xf32>
    %c0_43 = arith.constant 0 : index
    %c24 = arith.constant 24 : index
    %137 = vector.load %arg15[%c0_43, %c24] : memref<8x32xf32, #tpu.memory_space<vmem>>, vector<8x8xf32>
    tpu.vector_store %arg15[%c0_43, %c24], %136 {strides = array<i32>} : memref<8x32xf32, #tpu.memory_space<vmem>>, vector<8x8xf32>,
    %c0_44 = arith.constant 0 : index
    %c0_45 = arith.constant 0 : index
    %138 = vector.load %arg15[%c0_44, %c0_45] : memref<8x32xf32, #tpu.memory_space<vmem>>, vector<8x32xf32>
    %139 = arith.truncf %138 : vector<8x32xf32> to vector<8x32xbf16>
    %c0_46 = arith.constant 0 : index
    %c0_47 = arith.constant 0 : index
    %140 = vector.load %arg4[%c0_46, %c0_47] : memref<32x32xbf16, #tpu.memory_space<vmem>>, vector<32x32xbf16>
    %cst_48 = arith.constant dense<0.000000e+00> : vector<8x32xf32>
    %141 = tpu.matmul %139, %140, %cst_48 {dimension_numbers = #tpu.dot_dimension_numbers<[1], [0], [0], [1], [0, 0, 1, 1], [], []>} : vector<8x32xbf16>, vector<32x32xbf16>, vector<8x32xf32> -> vector<8x32xf32>
    %c0_49 = arith.constant 0 : index
    %c0_50 = arith.constant 0 : index
    %142 = vector.load %arg5[%c0_49, %c0_50] : memref<1x32xf32, #tpu.memory_space<vmem>>, vector<1x32xf32>
    %143 = vector.broadcast %142 : vector<1x32xf32> to vector<8x32xf32>
    %144 = arith.addf %141, %143 : vector<8x32xf32>
    %145 = arith.addf %144, %1 : vector<8x32xf32>
    %c0_51 = arith.constant 0 : index
    %c0_52 = arith.constant 0 : index
    %146 = vector.load %arg12[%c0_51, %c0_52] : memref<1x32xf32, #tpu.memory_space<vmem>>, vector<1x32xf32>
    %c0_53 = arith.constant 0 : index
    %c0_54 = arith.constant 0 : index
    %147 = vector.load %arg13[%c0_53, %c0_54] : memref<1x32xf32, #tpu.memory_space<vmem>>, vector<1x32xf32>
    %cst_55 = arith.constant dense<0.000000e+00> : vector<8xf32>
    %148 = vector.multi_reduction <add>, %145, %cst_55 [1] : vector<8x32xf32> to vector<8xf32>
    %149 = vector.shape_cast %148 : vector<8xf32> to vector<8x1xf32>
    %cst_56 = arith.constant 3.200000e+01 : f32
    %150 = vector.broadcast %cst_56 : f32 to vector<8x1xf32>
    %151 = arith.divf %149, %150 : vector<8x1xf32>
    %152 = vector.broadcast %151 : vector<8x1xf32> to vector<8x32xf32>
    %153 = arith.subf %145, %152 : vector<8x32xf32>
    %154 = arith.mulf %153, %153 : vector<8x32xf32>
    %cst_57 = arith.constant dense<0.000000e+00> : vector<8xf32>
    %155 = vector.multi_reduction <add>, %154, %cst_57 [1] : vector<8x32xf32> to vector<8xf32>
    %156 = vector.shape_cast %155 : vector<8xf32> to vector<8x1xf32>
    %cst_58 = arith.constant 3.200000e+01 : f32
    %157 = vector.broadcast %cst_58 : f32 to vector<8x1xf32>
    %158 = arith.divf %156, %157 : vector<8x1xf32>
    %159 = vector.broadcast %151 : vector<8x1xf32> to vector<8x32xf32>
    %160 = arith.subf %145, %159 : vector<8x32xf32>
    %cst_59 = arith.constant 9.99999974E-6 : f32
    %161 = vector.broadcast %cst_59 : f32 to vector<8x1xf32>
    %162 = arith.addf %158, %161 : vector<8x1xf32>
    %163 = math.rsqrt %162 : vector<8x1xf32>
    %164 = vector.broadcast %163 : vector<8x1xf32> to vector<8x32xf32>
    %165 = arith.mulf %160, %164 : vector<8x32xf32>
    %166 = vector.broadcast %146 : vector<1x32xf32> to vector<8x32xf32>
    %167 = arith.mulf %165, %166 : vector<8x32xf32>
    %168 = vector.broadcast %147 : vector<1x32xf32> to vector<8x32xf32>
    %169 = arith.addf %167, %168 : vector<8x32xf32>
    %170 = arith.truncf %169 : vector<8x32xf32> to vector<8x32xbf16>
    %c0_60 = arith.constant 0 : index
    %c0_61 = arith.constant 0 : index
    %171 = vector.load %arg6[%c0_60, %c0_61] : memref<32x64xbf16, #tpu.memory_space<vmem>>, vector<32x64xbf16>
    %cst_62 = arith.constant dense<0.000000e+00> : vector<8x64xf32>
    %172 = tpu.matmul %170, %171, %cst_62 {dimension_numbers = #tpu.dot_dimension_numbers<[1], [0], [0], [1], [0, 0, 1, 1], [], []>} : vector<8x32xbf16>, vector<32x64xbf16>, vector<8x64xf32> -> vector<8x64xf32>
    %c0_63 = arith.constant 0 : index
    %c0_64 = arith.constant 0 : index
    %173 = vector.load %arg7[%c0_63, %c0_64] : memref<1x64xf32, #tpu.memory_space<vmem>>, vector<1x64xf32>
    %174 = vector.broadcast %173 : vector<1x64xf32> to vector<8x64xf32>
    %175 = arith.addf %172, %174 : vector<8x64xf32>
    %cst_65 = arith.constant 5.000000e-01 : f32
    %176 = vector.broadcast %cst_65 : f32 to vector<8x64xf32>
    %177 = arith.mulf %176, %175 : vector<8x64xf32>
    %cst_66 = arith.constant 4.471500e-02 : f32
    %178 = vector.broadcast %cst_66 : f32 to vector<8x64xf32>
    %179 = arith.mulf %178, %175 : vector<8x64xf32>
    %180 = arith.mulf %179, %175 : vector<8x64xf32>
    %181 = arith.mulf %180, %175 : vector<8x64xf32>
    %182 = arith.addf %175, %181 : vector<8x64xf32>
    %cst_67 = arith.constant 0.797884583 : f32
    %183 = vector.broadcast %cst_67 : f32 to vector<8x64xf32>
    %184 = arith.mulf %183, %182 : vector<8x64xf32>
    %185 = math.tanh %184 : vector<8x64xf32>
    %cst_68 = arith.constant 1.000000e+00 : f32
    %186 = vector.broadcast %cst_68 : f32 to vector<8x64xf32>
    %187 = arith.addf %186, %185 : vector<8x64xf32>
    %188 = arith.mulf %177, %187 : vector<8x64xf32>
    %189 = arith.truncf %188 : vector<8x64xf32> to vector<8x64xbf16>
    %c0_69 = arith.constant 0 : index
    %c0_70 = arith.constant 0 : index
    %190 = vector.load %arg8[%c0_69, %c0_70] : memref<64x32xbf16, #tpu.memory_space<vmem>>, vector<64x32xbf16>
    %cst_71 = arith.constant dense<0.000000e+00> : vector<8x32xf32>
    %191 = tpu.matmul %189, %190, %cst_71 {dimension_numbers = #tpu.dot_dimension_numbers<[1], [0], [0], [1], [0, 0, 1, 1], [], []>} : vector<8x64xbf16>, vector<64x32xbf16>, vector<8x32xf32> -> vector<8x32xf32>
    %c0_72 = arith.constant 0 : index
    %c0_73 = arith.constant 0 : index
    %192 = vector.load %arg9[%c0_72, %c0_73] : memref<1x32xf32, #tpu.memory_space<vmem>>, vector<1x32xf32>
    %193 = vector.broadcast %192 : vector<1x32xf32> to vector<8x32xf32>
    %194 = arith.addf %191, %193 : vector<8x32xf32>
    %195 = arith.addf %194, %145 : vector<8x32xf32>
    %c0_74 = arith.constant 0 : index
    %c0_75 = arith.constant 0 : index
    %c0_76 = arith.constant 0 : index
    %196 = vector.load %arg14[%c0_74, %c0_75, %c0_76] : memref<1x8x32xf32, #tpu.memory_space<vmem>>, vector<1x8x32xf32>
    %197 = vector.shape_cast %196 : vector<1x8x32xf32> to vector<8x32xf32>
    %198 = vector.shape_cast %195 : vector<8x32xf32> to vector<1x8x32xf32>
    tpu.vector_store %arg14[%c0_74, %c0_75, %c0_76], %198 {strides = array<i32>} : memref<1x8x32xf32, #tpu.memory_space<vmem>>, vector<1x8x32xf32>,
    return
  }
  func.func @transform_0(%arg0: i32) -> (i32, i32, i32) {
    %c0_i32 = arith.constant 0 : i32
    %c0_i32_0 = arith.constant 0 : i32
    %c0_i32_1 = arith.constant 0 : i32
    return %arg0, %c0_i32, %c0_i32_0 : i32, i32, i32
  }
  func.func @transform_1(%arg0: i32) -> (i32, i32) {
    %c0_i32 = arith.constant 0 : i32
    %c0_i32_0 = arith.constant 0 : i32
    %c0_i32_1 = arith.constant 0 : i32
    return %c0_i32, %c0_i32_0 : i32, i32
  }
  func.func @transform_2(%arg0: i32) -> (i32, i32) {
    %c0_i32 = arith.constant 0 : i32
    %c0_i32_0 = arith.constant 0 : i32
    %c0_i32_1 = arith.constant 0 : i32
    return %c0_i32, %c0_i32_0 : i32, i32
  }
  func.func @transform_3(%arg0: i32) -> (i32, i32) {
    %c0_i32 = arith.constant 0 : i32
    %c0_i32_0 = arith.constant 0 : i32
    %c0_i32_1 = arith.constant 0 : i32
    return %c0_i32, %c0_i32_0 : i32, i32
  }
  func.func @transform_4(%arg0: i32) -> (i32, i32) {
    %c0_i32 = arith.constant 0 : i32
    %c0_i32_0 = arith.constant 0 : i32
    %c0_i32_1 = arith.constant 0 : i32
    return %c0_i32, %c0_i32_0 : i32, i32
  }
  func.func @transform_5(%arg0: i32) -> (i32, i32) {
    %c0_i32 = arith.constant 0 : i32
    %c0_i32_0 = arith.constant 0 : i32
    %c0_i32_1 = arith.constant 0 : i32
    return %c0_i32, %c0_i32_0 : i32, i32
  }
  func.func @transform_6(%arg0: i32) -> (i32, i32) {
    %c0_i32 = arith.constant 0 : i32
    %c0_i32_0 = arith.constant 0 : i32
    %c0_i32_1 = arith.constant 0 : i32
    return %c0_i32, %c0_i32_0 : i32, i32
  }
  func.func @transform_7(%arg0: i32) -> (i32, i32) {
    %c0_i32 = arith.constant 0 : i32
    %c0_i32_0 = arith.constant 0 : i32
    %c0_i32_1 = arith.constant 0 : i32
    return %c0_i32, %c0_i32_0 : i32, i32
  }
  func.func @transform_8(%arg0: i32) -> (i32, i32) {
    %c0_i32 = arith.constant 0 : i32
    %c0_i32_0 = arith.constant 0 : i32
    %c0_i32_1 = arith.constant 0 : i32
    return %c0_i32, %c0_i32_0 : i32, i32
  }
  func.func @transform_9(%arg0: i32) -> (i32, i32) {
    %c0_i32 = arith.constant 0 : i32
    %c0_i32_0 = arith.constant 0 : i32
    %c0_i32_1 = arith.constant 0 : i32
    return %c0_i32, %c0_i32_0 : i32, i32
  }
  func.func @transform_10(%arg0: i32) -> (i32, i32) {
    %c0_i32 = arith.constant 0 : i32
    %c0_i32_0 = arith.constant 0 : i32
    %c0_i32_1 = arith.constant 0 : i32
    return %c0_i32, %c0_i32_0 : i32, i32
  }
  func.func @transform_11(%arg0: i32) -> (i32, i32) {
    %c0_i32 = arith.constant 0 : i32
    %c0_i32_0 = arith.constant 0 : i32
    %c0_i32_1 = arith.constant 0 : i32
    return %c0_i32, %c0_i32_0 : i32, i32
  }
  func.func @transform_12(%arg0: i32) -> (i32, i32) {
    %c0_i32 = arith.constant 0 : i32
    %c0_i32_0 = arith.constant 0 : i32
    %c0_i32_1 = arith.constant 0 : i32
    return %c0_i32, %c0_i32_0 : i32, i32
  }
  func.func @transform_13(%arg0: i32) -> (i32, i32, i32) {
    %c0_i32 = arith.constant 0 : i32
    %c0_i32_0 = arith.constant 0 : i32
    %c0_i32_1 = arith.constant 0 : i32
    return %arg0, %c0_i32, %c0_i32_0 : i32, i32, i32
  }
}

</mosaic_0001>

<llo_original>
// kernel: tpu_custom_call.1
$region0: #{tpu_custom_call.1}
  #allocation0 [shape = 'u32[]', space=smem, size = 0x4, offset = 0x4, fixed_abs, tag = 'smem constant byte address 0x4 - core index']
  #allocation1 [shape = 'u32[144,128]{1,0:T(1,128)}', space=vmem, size = 0x12000, scoped, tag = 'internal scratch']
  #allocation2 [shape = 'f32[8,32]{1,0:T(8,128)}', space=vmem, size = 0x1000, scoped, tag = 'scratch operand']
  %s0 = inlined_call_operand.vmem [shape: f32[2,8,32], index: 0, kind: input, shape index: {}]
  %s1 = inlined_call_operand.vmem [shape: bf16[32,96], index: 1, kind: input, shape index: {}]
  %s2 = inlined_call_operand.vmem [shape: f32[1,96], index: 2, kind: input, shape index: {}]
  %s3 = inlined_call_operand.vmem [shape: bf16[32,32], index: 3, kind: input, shape index: {}]
  %s4 = inlined_call_operand.vmem [shape: f32[1,32], index: 4, kind: input, shape index: {}]
  %s5 = inlined_call_operand.hbm [shape: bf16[32,64], index: 5, kind: input, shape index: {}]
  %s6 = inlined_call_operand.vmem [shape: f32[1,64], index: 6, kind: input, shape index: {}]
  %s7 = inlined_call_operand.vmem [shape: bf16[64,32], index: 7, kind: input, shape index: {}]
  %s8 = inlined_call_operand.vmem [shape: f32[1,32], index: 8, kind: input, shape index: {}]
  %s9 = inlined_call_operand.vmem [shape: f32[1,32], index: 9, kind: input, shape index: {}]
  %s10 = inlined_call_operand.vmem [shape: f32[1,32], index: 10, kind: input, shape index: {}]
  %s11 = inlined_call_operand.vmem [shape: f32[1,32], index: 11, kind: input, shape index: {}]
  %s12 = inlined_call_operand.vmem [shape: f32[1,32], index: 12, kind: input, shape index: {}]
  %s13 = inlined_call_operand.hbm [shape: f32[2,8,32], index: 13, kind: output, shape index: {}]
  %s14 = sld [smem:[#allocation0]]
  $region89: #{tpu_custom_call.1} parent=0
    _
  %s16 = ssub.s32 1, %s14
  %s17 = scalar_select 0, %s16, %s14
  $region1: #{tpu_custom_call.1} parent=0
    #allocation3 [shape = 'u8[8192]{0}', space=vmem, size = 0x2000, scoped, tag = 'input window, operand 5, single buffered']
    #allocation4 [shape = 's32[2]{0}', space=sflag, size = 0x8, scoped, tag = 'scoped memory for tpu_custom_call.1']
    #allocation5 [shape = 's32[2]{0}', space=sflag, size = 0x8, scoped, tag = 'scoped memory for tpu_custom_call.1']
    #allocation6 [shape = 'u8[8192]{0}', space=vmem, size = 0x2000, scoped, tag = 'output window, operand 0']
    %18 = vsyncpa [#allocation4], 0
    %19 = vsyncpa [#allocation5], 0
    %s20 = scalar_lea.sflag [#allocation5], 1
    %21 = vsyncpa %s20, 0
    loop: start=0, step=1, limit=4
    $region2: #{tpu_custom_call.1} parent=1 // loop_pre_header
      _
    $region3: #{tpu_custom_call.1} parent=1 // loop_header
      %s23 = sphi 0, %s27
      %p24 = scmp.ge.s32.totalorder %s23, 4
      %s33 = sphi 0, %s35
      %s36 = sphi 0, %s33
      %s37 = sphi 0, %s36
      %s53 = sphi 0, %s37
      %s57 = sphi 0, %s57
      %s59 = sphi 0, %s57
      %s60 = sphi 0, %s59
      %s74 = sphi 0, %s60
      %s78 = sphi 0, %s78
      %s80 = sphi 0, %s78
      %s81 = sphi 0, %s80
      %s95 = sphi 0, %s81
      %s99 = sphi 0, %s99
      %s101 = sphi 0, %s99
      %s102 = sphi 0, %s101
      %s116 = sphi 0, %s102
      %s120 = sphi 0, %s120
      %s122 = sphi 0, %s120
      %s123 = sphi 0, %s122
      %s137 = sphi 0, %s123
      %s141 = sphi 0, %s141
      %s143 = sphi 0, %s141
      %s144 = sphi 0, %s143
      %s158 = sphi 0, %s144
      %s162 = sphi 0, %s162
      %s164 = sphi 0, %s162
      %s165 = sphi 0, %s164
      %s179 = sphi 0, %s165
      %s183 = sphi 0, %s183
      %s185 = sphi 0, %s183
      %s186 = sphi 0, %s185
      %s200 = sphi 0, %s186
      %s204 = sphi 0, %s204
      %s206 = sphi 0, %s204
      %s207 = sphi 0, %s206
      %s221 = sphi 0, %s207
      %s225 = sphi 0, %s225
      %s227 = sphi 0, %s225
      %s228 = sphi 0, %s227
      %s242 = sphi 0, %s228
      %s246 = sphi 0, %s246
      %s248 = sphi 0, %s246
      %s249 = sphi 0, %s248
      %s263 = sphi 0, %s249
      %s267 = sphi 0, %s267
      %s269 = sphi 0, %s267
      %s270 = sphi 0, %s269
      %s284 = sphi 0, %s270
      %s288 = sphi 0, %s288
      %s290 = sphi 0, %s288
      %s291 = sphi 0, %s290
      %s305 = sphi 0, %s291
      %s311 = sphi 0, %s313
      %s314 = sphi 0, %s311
      %s315 = sphi 0, %s314
      %s331 = sphi 0, %s315
    $region4: #{tpu_custom_call.1} parent=1 // loop_header_branch
      %26 = sbr.rel (%p24) target = $region8
    $region5: #{tpu_custom_call.1} parent=1 // loop_body
      %s28 = ssub.s32 %s23, 1
      %s29 = ssub.s32 %s23, 2
      %s30 = sadd.s32 %s23, 1
      %s31 = ssub.s32 %s23, %s30
      %p32 = scmp.eq.s32.totalorder %s31, 0
      %s34 = sadd.s32 %s33, 1
      %s35 = scalar_select %p32, %s33, %s34
      %p38 = pneg %p32
      %p39 = scmp.eq.s32.totalorder %s23, 1
      %p40 = por %p38, %p39
      %p41 = scmp.ne.s32.totalorder %s33, %s36
      %p42 = scmp.eq.s32.totalorder %s23, 0
      %p43 = por %p41, %p42
      %p44 = scmp.ne.s32.totalorder %s33, %s36
      %p45 = scmp.eq.s32.totalorder %s28, 1
      %p46 = por %p44, %p45
      %p47 = scmp.ne.s32.totalorder %s36, %s37
      %p48 = scmp.eq.s32.totalorder %s28, 0
      %p49 = por %p47, %p48
      %p50 = scmp.ne.s32.totalorder %s36, %s37
      %p51 = scmp.eq.s32.totalorder %s29, 1
      %p52 = por %p50, %p51
      %p54 = scmp.ne.s32.totalorder %s37, %s53
      %p55 = scmp.eq.s32.totalorder %s29, 0
      %p56 = por %p54, %p55
      %s58 = sadd.s32 %s57, 1
      %p61 = scmp.eq.s32.totalorder %s23, 1
      %p62 = scmp.ne.s32.totalorder %s57, %s59
      %p63 = scmp.eq.s32.totalorder %s23, 0
      %p64 = por %p62, %p63
      %p65 = scmp.ne.s32.totalorder %s57, %s59
      %p66 = scmp.eq.s32.totalorder %s28, 1
      %p67 = por %p65, %p66
      %p68 = scmp.ne.s32.totalorder %s59, %s60
      %p69 = scmp.eq.s32.totalorder %s28, 0
      %p70 = por %p68, %p69
      %p71 = scmp.ne.s32.totalorder %s59, %s60
      %p72 = scmp.eq.s32.totalorder %s29, 1
      %p73 = por %p71, %p72
      %p75 = scmp.ne.s32.totalorder %s60, %s74
      %p76 = scmp.eq.s32.totalorder %s29, 0
      %p77 = por %p75, %p76
      %s79 = sadd.s32 %s78, 1
      %p82 = scmp.eq.s32.totalorder %s23, 1
      %p83 = scmp.ne.s32.totalorder %s78, %s80
      %p84 = scmp.eq.s32.totalorder %s23, 0
      %p85 = por %p83, %p84
      %p86 = scmp.ne.s32.totalorder %s78, %s80
      %p87 = scmp.eq.s32.totalorder %s28, 1
      %p88 = por %p86, %p87
      %p89 = scmp.ne.s32.totalorder %s80, %s81
      %p90 = scmp.eq.s32.totalorder %s28, 0
      %p91 = por %p89, %p90
      %p92 = scmp.ne.s32.totalorder %s80, %s81
      %p93 = scmp.eq.s32.totalorder %s29, 1
      %p94 = por %p92, %p93
      %p96 = scmp.ne.s32.totalorder %s81, %s95
      %p97 = scmp.eq.s32.totalorder %s29, 0
      %p98 = por %p96, %p97
      %s100 = sadd.s32 %s99, 1
      %p103 = scmp.eq.s32.totalorder %s23, 1
      %p104 = scmp.ne.s32.totalorder %s99, %s101
      %p105 = scmp.eq.s32.totalorder %s23, 0
      %p106 = por %p104, %p105
      %p107 = scmp.ne.s32.totalorder %s99, %s101
      %p108 = scmp.eq.s32.totalorder %s28, 1
      %p109 = por %p107, %p108
      %p110 = scmp.ne.s32.totalorder %s101, %s102
      %p111 = scmp.eq.s32.totalorder %s28, 0
      %p112 = por %p110, %p111
      %p113 = scmp.ne.s32.totalorder %s101, %s102
      %p114 = scmp.eq.s32.totalorder %s29, 1
      %p115 = por %p113, %p114
      %p117 = scmp.ne.s32.totalorder %s102, %s116
      %p118 = scmp.eq.s32.totalorder %s29, 0
      %p119 = por %p117, %p118
      %s121 = sadd.s32 %s120, 1
      %p124 = scmp.eq.s32.totalorder %s23, 1
      %p125 = scmp.ne.s32.totalorder %s120, %s122
      %p126 = scmp.eq.s32.totalorder %s23, 0
      %p127 = por %p125, %p126
      %p128 = scmp.ne.s32.totalorder %s120, %s122
      %p129 = scmp.eq.s32.totalorder %s28, 1
      %p130 = por %p128, %p129
      %p131 = scmp.ne.s32.totalorder %s122, %s123
      %p132 = scmp.eq.s32.totalorder %s28, 0
      %p133 = por %p131, %p132
      %p134 = scmp.ne.s32.totalorder %s122, %s123
      %p135 = scmp.eq.s32.totalorder %s29, 1
      %p136 = por %p134, %p135
      %p138 = scmp.ne.s32.totalorder %s123, %s137
      %p139 = scmp.eq.s32.totalorder %s29, 0
      %p140 = por %p138, %p139
      %s142 = sadd.s32 %s141, 1
      %p145 = scmp.eq.s32.totalorder %s23, 1
      %p146 = scmp.ne.s32.totalorder %s141, %s143
      %p147 = scmp.eq.s32.totalorder %s23, 0
      %p148 = por %p146, %p147
      %p149 = scmp.ne.s32.totalorder %s141, %s143
      %p150 = scmp.eq.s32.totalorder %s28, 1
      %p151 = por %p149, %p150
      %p152 = scmp.ne.s32.totalorder %s143, %s144
      %p153 = scmp.eq.s32.totalorder %s28, 0
      %p154 = por %p152, %p153
      %p155 = scmp.ne.s32.totalorder %s143, %s144
      %p156 = scmp.eq.s32.totalorder %s29, 1
      %p157 = por %p155, %p156
      %p159 = scmp.ne.s32.totalorder %s144, %s158
      %p160 = scmp.eq.s32.totalorder %s29, 0
      %p161 = por %p159, %p160
      %s163 = sadd.s32 %s162, 1
      %p166 = scmp.eq.s32.totalorder %s23, 1
      %p167 = scmp.ne.s32.totalorder %s162, %s164
      %p168 = scmp.eq.s32.totalorder %s23, 0
      %p169 = por %p167, %p168
      %p170 = scmp.ne.s32.totalorder %s162, %s164
      %p171 = scmp.eq.s32.totalorder %s28, 1
      %p172 = por %p170, %p171
      %p173 = scmp.ne.s32.totalorder %s164, %s165
      %p174 = scmp.eq.s32.totalorder %s28, 0
      %p175 = por %p173, %p174
      %p176 = scmp.ne.s32.totalorder %s164, %s165
      %p177 = scmp.eq.s32.totalorder %s29, 1
      %p178 = por %p176, %p177
      %p180 = scmp.ne.s32.totalorder %s165, %s179
      %p181 = scmp.eq.s32.totalorder %s29, 0
      %p182 = por %p180, %p181
      %s184 = sadd.s32 %s183, 1
      %p187 = scmp.eq.s32.totalorder %s23, 1
      %p188 = scmp.ne.s32.totalorder %s183, %s185
      %p189 = scmp.eq.s32.totalorder %s23, 0
      %p190 = por %p188, %p189
      %p191 = scmp.ne.s32.totalorder %s183, %s185
      %p192 = scmp.eq.s32.totalorder %s28, 1
      %p193 = por %p191, %p192
      %p194 = scmp.ne.s32.totalorder %s185, %s186
      %p195 = scmp.eq.s32.totalorder %s28, 0
      %p196 = por %p194, %p195
      %p197 = scmp.ne.s32.totalorder %s185, %s186
      %p198 = scmp.eq.s32.totalorder %s29, 1
      %p199 = por %p197, %p198
      %p201 = scmp.ne.s32.totalorder %s186, %s200
      %p202 = scmp.eq.s32.totalorder %s29, 0
      %p203 = por %p201, %p202
      %s205 = sadd.s32 %s204, 1
      %p208 = scmp.eq.s32.totalorder %s23, 1
      %p209 = scmp.ne.s32.totalorder %s204, %s206
      %p210 = scmp.eq.s32.totalorder %s23, 0
      %p211 = por %p209, %p210
      %p212 = scmp.ne.s32.totalorder %s204, %s206
      %p213 = scmp.eq.s32.totalorder %s28, 1
      %p214 = por %p212, %p213
      %p215 = scmp.ne.s32.totalorder %s206, %s207
      %p216 = scmp.eq.s32.totalorder %s28, 0
      %p217 = por %p215, %p216
      %p218 = scmp.ne.s32.totalorder %s206, %s207
      %p219 = scmp.eq.s32.totalorder %s29, 1
      %p220 = por %p218, %p219
      %p222 = scmp.ne.s32.totalorder %s207, %s221
      %p223 = scmp.eq.s32.totalorder %s29, 0
      %p224 = por %p222, %p223
      %s226 = sadd.s32 %s225, 1
      %p229 = scmp.eq.s32.totalorder %s23, 1
      %p230 = scmp.ne.s32.totalorder %s225, %s227
      %p231 = scmp.eq.s32.totalorder %s23, 0
      %p232 = por %p230, %p231
      %p233 = scmp.ne.s32.totalorder %s225, %s227
      %p234 = scmp.eq.s32.totalorder %s28, 1
      %p235 = por %p233, %p234
      %p236 = scmp.ne.s32.totalorder %s227, %s228
      %p237 = scmp.eq.s32.totalorder %s28, 0
      %p238 = por %p236, %p237
      %p239 = scmp.ne.s32.totalorder %s227, %s228
      %p240 = scmp.eq.s32.totalorder %s29, 1
      %p241 = por %p239, %p240
      %p243 = scmp.ne.s32.totalorder %s228, %s242
      %p244 = scmp.eq.s32.totalorder %s29, 0
      %p245 = por %p243, %p244
      %s247 = sadd.s32 %s246, 1
      %p250 = scmp.eq.s32.totalorder %s23, 1
      %p251 = scmp.ne.s32.totalorder %s246, %s248
      %p252 = scmp.eq.s32.totalorder %s23, 0
      %p253 = por %p251, %p252
      %p254 = scmp.ne.s32.totalorder %s246, %s248
      %p255 = scmp.eq.s32.totalorder %s28, 1
      %p256 = por %p254, %p255
      %p257 = scmp.ne.s32.totalorder %s248, %s249
      %p258 = scmp.eq.s32.totalorder %s28, 0
      %p259 = por %p257, %p258
      %p260 = scmp.ne.s32.totalorder %s248, %s249
      %p261 = scmp.eq.s32.totalorder %s29, 1
      %p262 = por %p260, %p261
      %p264 = scmp.ne.s32.totalorder %s249, %s263
      %p265 = scmp.eq.s32.totalorder %s29, 0
      %p266 = por %p264, %p265
      %s268 = sadd.s32 %s267, 1
      %p271 = scmp.eq.s32.totalorder %s23, 1
      %p272 = scmp.ne.s32.totalorder %s267, %s269
      %p273 = scmp.eq.s32.totalorder %s23, 0
      %p274 = por %p272, %p273
      %p275 = scmp.ne.s32.totalorder %s267, %s269
      %p276 = scmp.eq.s32.totalorder %s28, 1
      %p277 = por %p275, %p276
      %p278 = scmp.ne.s32.totalorder %s269, %s270
      %p279 = scmp.eq.s32.totalorder %s28, 0
      %p280 = por %p278, %p279
      %p281 = scmp.ne.s32.totalorder %s269, %s270
      %p282 = scmp.eq.s32.totalorder %s29, 1
      %p283 = por %p281, %p282
      %p285 = scmp.ne.s32.totalorder %s270, %s284
      %p286 = scmp.eq.s32.totalorder %s29, 0
      %p287 = por %p285, %p286
      %s289 = sadd.s32 %s288, 1
      %p292 = scmp.eq.s32.totalorder %s23, 1
      %p293 = scmp.ne.s32.totalorder %s288, %s290
      %p294 = scmp.eq.s32.totalorder %s23, 0
      %p295 = por %p293, %p294
      %p296 = scmp.ne.s32.totalorder %s288, %s290
      %p297 = scmp.eq.s32.totalorder %s28, 1
      %p298 = por %p296, %p297
      %p299 = scmp.ne.s32.totalorder %s290, %s291
      %p300 = scmp.eq.s32.totalorder %s28, 0
      %p301 = por %p299, %p300
      %p302 = scmp.ne.s32.totalorder %s290, %s291
      %p303 = scmp.eq.s32.totalorder %s29, 1
      %p304 = por %p302, %p303
      %p306 = scmp.ne.s32.totalorder %s291, %s305
      %p307 = scmp.eq.s32.totalorder %s29, 0
      %p308 = por %p306, %p307
      %s309 = ssub.s32 %s23, %s30
      %p310 = scmp.eq.s32.totalorder %s309, 0
      %s312 = sadd.s32 %s311, 1
      %s313 = scalar_select %p310, %s311, %s312
      %p316 = pneg %p310
      %p317 = scmp.eq.s32.totalorder %s23, 1
      %p318 = por %p316, %p317
      %p319 = scmp.ne.s32.totalorder %s311, %s314
      %p320 = scmp.eq.s32.totalorder %s23, 0
      %p321 = por %p319, %p320
      %p322 = scmp.ne.s32.totalorder %s311, %s314
      %p323 = scmp.eq.s32.totalorder %s28, 1
      %p324 = por %p322, %p323
      %p325 = scmp.ne.s32.totalorder %s314, %s315
      %p326 = scmp.eq.s32.totalorder %s28, 0
      %p327 = por %p325, %p326
      %p328 = scmp.ne.s32.totalorder %s314, %s315
      %p329 = scmp.eq.s32.totalorder %s29, 1
      %p330 = por %p328, %p329
      %p332 = scmp.ne.s32.totalorder %s315, %s331
      %p333 = scmp.eq.s32.totalorder %s29, 0
      %p334 = por %p332, %p333
      %p335 = scmp.le.s32.totalorder 1, %s23
      %p336 = scmp.lt.s32.totalorder %s23, 3
      %p337 = pnand %p335, %p336
      %p338 = pneg %p337
      // Predicated region
      $region9: #{tpu_custom_call.1} parent=5 // pred_check
        _
      $region10: #{tpu_custom_call.1} parent=5 // pred_check_branch
        %340 = sbr.rel (%p337) target = $region12
      $region11: #{tpu_custom_call.1} parent=5 // pred_region
        %s341 = ssub.s32 %s23, 1
        // Predicated region
        $region13: #{tpu_custom_call.1} parent=11 // pred_check
          %p342 = pneg %p70
        $region14: #{tpu_custom_call.1} parent=11 // pred_check_branch
          %344 = sbr.rel (%p342) target = $region16
        $region15: #{tpu_custom_call.1} parent=11 // pred_region
          _
        $region16: #{tpu_custom_call.1} parent=11 // pred_fallthru
          _
        // Predicated region
        $region17: #{tpu_custom_call.1} parent=11 // pred_check
          %p345 = pneg %p91
        $region18: #{tpu_custom_call.1} parent=11 // pred_check_branch
          %347 = sbr.rel (%p345) target = $region20
        $region19: #{tpu_custom_call.1} parent=11 // pred_region
          _
        $region20: #{tpu_custom_call.1} parent=11 // pred_fallthru
          _
        // Predicated region
        $region21: #{tpu_custom_call.1} parent=11 // pred_check
          %p348 = pneg %p112
        $region22: #{tpu_custom_call.1} parent=11 // pred_check_branch
          %350 = sbr.rel (%p348) target = $region24
        $region23: #{tpu_custom_call.1} parent=11 // pred_region
          _
        $region24: #{tpu_custom_call.1} parent=11 // pred_fallthru
          _
        // Predicated region
        $region25: #{tpu_custom_call.1} parent=11 // pred_check
          %p351 = pneg %p133
        $region26: #{tpu_custom_call.1} parent=11 // pred_check_branch
          %353 = sbr.rel (%p351) target = $region28
        $region27: #{tpu_custom_call.1} parent=11 // pred_region
          _
        $region28: #{tpu_custom_call.1} parent=11 // pred_fallthru
          _
        // Predicated region
        $region29: #{tpu_custom_call.1} parent=11 // pred_check
          %p354 = pneg %p154
        $region30: #{tpu_custom_call.1} parent=11 // pred_check_branch
          %356 = sbr.rel (%p354) target = $region32
        $region31: #{tpu_custom_call.1} parent=11 // pred_region
          %s358 = ssub.s32 256, 256
          %359 = vsyncadd [#allocation4], %s358
          %s360 = sshll.u32 [#allocation3], 4
          %s361 = int_to_ptr.vmem [resolvable:$true] %s360
          %366 = dma.hbm_to_vmem [thread:$0]  %s5, 256, %s361, [#allocation4], 64, 64, 4
        $region32: #{tpu_custom_call.1} parent=11 // pred_fallthru
          _
        // Predicated region
        $region33: #{tpu_custom_call.1} parent=11 // pred_check
          %p367 = pneg %p175
        $region34: #{tpu_custom_call.1} parent=11 // pred_check_branch
          %369 = sbr.rel (%p367) target = $region36
        $region35: #{tpu_custom_call.1} parent=11 // pred_region
          _
        $region36: #{tpu_custom_call.1} parent=11 // pred_fallthru
          _
        // Predicated region
        $region37: #{tpu_custom_call.1} parent=11 // pred_check
          %p370 = pneg %p196
        $region38: #{tpu_custom_call.1} parent=11 // pred_check_branch
          %372 = sbr.rel (%p370) target = $region40
        $region39: #{tpu_custom_call.1} parent=11 // pred_region
          _
        $region40: #{tpu_custom_call.1} parent=11 // pred_fallthru
          _
        // Predicated region
        $region41: #{tpu_custom_call.1} parent=11 // pred_check
          %p373 = pneg %p217
        $region42: #{tpu_custom_call.1} parent=11 // pred_check_branch
          %375 = sbr.rel (%p373) target = $region44
        $region43: #{tpu_custom_call.1} parent=11 // pred_region
          _
        $region44: #{tpu_custom_call.1} parent=11 // pred_fallthru
          _
        // Predicated region
        $region45: #{tpu_custom_call.1} parent=11 // pred_check
          %p376 = pneg %p238
        $region46: #{tpu_custom_call.1} parent=11 // pred_check_branch
          %378 = sbr.rel (%p376) target = $region48
        $region47: #{tpu_custom_call.1} parent=11 // pred_region
          _
        $region48: #{tpu_custom_call.1} parent=11 // pred_fallthru
          _
        // Predicated region
        $region49: #{tpu_custom_call.1} parent=11 // pred_check
          %p379 = pneg %p259
        $region50: #{tpu_custom_call.1} parent=11 // pred_check_branch
          %381 = sbr.rel (%p379) target = $region52
        $region51: #{tpu_custom_call.1} parent=11 // pred_region
          _
        $region52: #{tpu_custom_call.1} parent=11 // pred_fallthru
          _
        // Predicated region
        $region53: #{tpu_custom_call.1} parent=11 // pred_check
          %p382 = pneg %p280
        $region54: #{tpu_custom_call.1} parent=11 // pred_check_branch
          %384 = sbr.rel (%p382) target = $region56
        $region55: #{tpu_custom_call.1} parent=11 // pred_region
          _
        $region56: #{tpu_custom_call.1} parent=11 // pred_fallthru
          _
        // Predicated region
        $region57: #{tpu_custom_call.1} parent=11 // pred_check
          %p385 = pneg %p301
        $region58: #{tpu_custom_call.1} parent=11 // pred_check_branch
          %387 = sbr.rel (%p385) target = $region60
        $region59: #{tpu_custom_call.1} parent=11 // pred_region
          _
        $region60: #{tpu_custom_call.1} parent=11 // pred_fallthru
          _
      $region12: #{tpu_custom_call.1} parent=5 // pred_fallthru
        _
      %p388 = scmp.lt.s32.totalorder %s23, 2
      // Predicated region
      $region61: #{tpu_custom_call.1} parent=5 // pred_check
        %p389 = pneg %p388
      $region62: #{tpu_custom_call.1} parent=5 // pred_check_branch
        %391 = sbr.rel (%p389) target = $region64
      $region63: #{tpu_custom_call.1} parent=5 // pred_region
        // Predicated region
        $region65: #{tpu_custom_call.1} parent=63 // pred_check
          %p392 = pneg %p43
        $region66: #{tpu_custom_call.1} parent=63 // pred_check_branch
          %394 = sbr.rel (%p392) target = $region68
        $region67: #{tpu_custom_call.1} parent=63 // pred_region
          %p395 = scmp.lt.s32.totalorder %s23, 1
          %s396 = scalar_select %p395, %s23, 1
          %s397 = smul.addr %s396, 8
          %s398 = scalar_lea.vmem %s0, %s397
        $region68: #{tpu_custom_call.1} parent=63 // pred_fallthru
          _
      $region64: #{tpu_custom_call.1} parent=5 // pred_fallthru
        _
      %p399 = scmp.le.s32.totalorder 1, %s23
      %p400 = scmp.lt.s32.totalorder %s23, 3
      %p401 = pnand %p399, %p400
      %p402 = pneg %p401
      // Predicated region
      $region69: #{tpu_custom_call.1} parent=5 // pred_check
        _
      $region70: #{tpu_custom_call.1} parent=5 // pred_check_branch
        %404 = sbr.rel (%p401) target = $region72
      $region71: #{tpu_custom_call.1} parent=5 // pred_region
        %s405 = ssub.s32 %s23, 1
        // Predicated region
        $region73: #{tpu_custom_call.1} parent=71 // pred_check
          %p406 = pneg %p154
        $region74: #{tpu_custom_call.1} parent=71 // pred_check_branch
          %408 = sbr.rel (%p406) target = $region76
        $region75: #{tpu_custom_call.1} parent=71 // pred_region
          %409 = dma.done [#allocation4], 256
        $region76: #{tpu_custom_call.1} parent=71 // pred_fallthru
          _
        %p410 = scmp.lt.s32.totalorder %s28, 1
        %s411 = scalar_select %p410, %s28, 1
        %s412 = smul.addr %s411, 8
        %s413 = scalar_lea.vmem %s0, %s412
        %p414 = pneg %p49
        %p415 = pneg %p46
        %p416 = pneg %p70
        %p417 = pneg %p67
        %p418 = pneg %p91
        %p419 = pneg %p88
        %p420 = pneg %p112
        %p421 = pneg %p109
        %p422 = pneg %p133
        %p423 = pneg %p130
        %p424 = pneg %p154
        %p425 = pneg %p151
        %p426 = pneg %p175
        %p427 = pneg %p172
        %p428 = pneg %p196
        %p429 = pneg %p193
        %p430 = pneg %p217
        %p431 = pneg %p214
        %p432 = pneg %p238
        %p433 = pneg %p235
        %p434 = pneg %p259
        %p435 = pneg %p256
        %p436 = pneg %p280
        %p437 = pneg %p277
        %p438 = pneg %p301
        %p439 = pneg %p298
        %p440 = pneg %p327
        %p441 = pneg %p324
        %s442 = sand.u32 %s314, 1
        %s443 = scalar_lea.sflag [#allocation5], %s442
        %s444 = sand.u32 %s314, 1
        %s445 = smul.addr %s444, 8
        %s446 = scalar_lea.vmem [#allocation6], %s445
        %p447 = scmp.lt.s32.totalorder %s28, 1
        %s448 = scalar_select %p447, %s28, 1
        %s449 = smul.addr %s448, 8
        %s450 = scalar_lea.vmem %s0, %s449
        %v452 = vld [vmem:[%s450] sm:$0xff]
        %v453 = vld [vmem:[%s9] sm:$0x1]
        %v454 = vld [vmem:[%s10] sm:$0x1]
        %vm455 = vcmask 261120
        %v456 = vsel %vm455, %v452, 0.0
        %457 = vadd.xlane.f32.xlu0 %v456
        %v458 = vpop.xlane.xlu0 %457
        %v459 = vrcp.pop 32.0
        %v460 = vmul.f32 %v458, %v459
        %v461 = vsub.f32 %v452, %v460
        %v462 = vmul.f32 %v461, %v461
        %v463 = vsel %vm455, %v462, 0.0
        %464 = vadd.xlane.f32.xlu0 %v463
        %v465 = vpop.xlane.xlu0 %464
        %v466 = vmul.f32 %v465, %v459
        %v467 = vadd.f32 %v466, 1e-05
        %v468 = vrsqrt.pop %v467
        %v469 = vmul.f32 %v461, %v468
        %v471 = vlaneseq
        %v472 = vshrl.u32 %v471, 7
        %v473 = vsub.s32 0, %v472
        %v474 = vrot.slane %v453, %v473
        %v476 = vmul.f32 %v469, %v474
        %v478 = vlaneseq
        %v479 = vshrl.u32 %v478, 7
        %v480 = vsub.s32 0, %v479
        %v481 = vrot.slane %v454, %v480
        %v483 = vadd.f32 %v476, %v481
        %v484 = vpack.c.bf16 %v483, %v483
        %v485 = vld [vmem:[%s1] sm:$0xf]
        %v486 = vld [vmem:[%s1 + $0x4] sm:$0xf]
        %v487 = vld [vmem:[%s1 + $0x8] sm:$0xf]
        %v488 = vld [vmem:[%s1 + $0xc] sm:$0xf]
        %v489 = vld [vmem:[%s2] sm:$0x1]
        %v491 = vlaneseq
        %v492 = vshrl.u32 %v491, 7
        %v493 = vsub.s32 0, %v492
        %v494 = vrot.slane %v489, %v493
        %v500 = vunpack.c.l.b16 %v485
        %v501 = vunpack.c.l.b16 %v486
        %v502 = vunpack.c.l.b16 %v487
        %v503 = vunpack.c.l.b16 %v488
        %v504 = vpack.c.b16 %v501, %v500
        %v505 = vpack.c.b16 %v503, %v502
        %v509 = vsel %vm455, %v484, 0
        %511 = vmatprep.subr.bf16.mxu0 0
        %512 = vmatpush1.bf16.msra.mxu0 %v504
        %513 = vmatprep.subr.bf16.mxu0 0
        %514 = vmatpush1.bf16.msra.mxu0 %v505
        %515 = vmatprep.subr.bf16.mxu0 0
        %516 = vmatpush1.bf16.msra.mxu0 0
        %517 = vmatprep.subr.bf16.mxu0 0
        %518 = vmatpush1.bf16.msra.mxu0 0
        %519 = vmatprep.subr.bf16.mxu0 0
        %520 = vmatpush1.bf16.msra.mxu0 0
        %521 = vmatprep.subr.bf16.mxu0 0
        %522 = vmatpush1.bf16.msra.mxu0 0
        %523 = vmatprep.subr.bf16.mxu0 0
        %524 = vmatpush1.bf16.msra.mxu0 0
        %525 = vmatprep.subr.bf16.mxu0 0
        %526 = vmatpush1.bf16.msra.mxu0 0
        %527 = vmatprep.subr.bf16.mxu0 0
        %528 = vmatpush1.bf16.msra.mxu0 0
        %529 = vmatprep.subr.bf16.mxu0 0
        %530 = vmatpush1.bf16.msra.mxu0 0
        %531 = vmatprep.subr.bf16.mxu0 0
        %532 = vmatpush1.bf16.msra.mxu0 0
        %533 = vmatprep.subr.bf16.mxu0 0
        %534 = vmatpush1.bf16.msra.mxu0 0
        %535 = vmatprep.subr.bf16.mxu0 0
        %536 = vmatpush1.bf16.msra.mxu0 0
        %537 = vmatprep.subr.bf16.mxu0 0
        %538 = vmatpush1.bf16.msra.mxu0 0
        %539 = vmatprep.subr.bf16.mxu0 0
        %540 = vmatpush1.bf16.msra.mxu0 0
        %541 = vmatprep.subr.bf16.mxu0 0
        %542 = vmatpush1.bf16.msra.mxu0 0
        %543 = vmatprep.mubr.bf16.mxu0 0
        %544 = vmatmul.mubr.bf16.gmra.mrb[0].mxu0 %v509
        %v545 = vpop.f32.mrb[0].mxu0
        %v546 = vadd.f32 %v494, %v545
        %v547 = vpop.f32.mrb[0].mxu0
        %v548 = vpop.f32.mrb[0].mxu0
        %v549 = vpop.f32.mrb[0].mxu0
        %550 = vdwg.mxu0
        %v551 = vlaneseq
        %v552 = vshrl.u32 %v551, 7
        %v553 = vlaneseq
        %v554 = vand.u32 %v553, 127
        %vm555 = vcmp.le.s32.totalorder %v554, %v552
        %v556 = vmul.f32 %v546, 0.35355338
        %v557 = vpack.c.bf16 %v556, %v556
        %v558 = vpack.c.bf16 %v546, %v546
        %560 = vrot.lane.b32.xlu0 %v558, 96
        %v561 = vpop.permute.xlu0 %560
        %vm562 = vcmask 64512
        %v564 = vsel %vm562, %v557, 0
        %v567 = vsel %vm562, %v561, 0
        %569 = vmatprep.subr.bf16.mxu0 0
        %570 = vmatpush1.bf16.xpose.msra.mxu0 %v567
        %571 = vmatprep.subr.bf16.mxu0 0
        %572 = vmatpush1.bf16.xpose.msra.mxu0 0
        %573 = vmatprep.subr.bf16.mxu0 0
        %574 = vmatpush1.bf16.xpose.msra.mxu0 0
        %575 = vmatprep.subr.bf16.mxu0 0
        %576 = vmatpush1.bf16.xpose.msra.mxu0 0
        %577 = vmatprep.subr.bf16.mxu0 0
        %578 = vmatpush1.bf16.xpose.msra.mxu0 0
        %579 = vmatprep.subr.bf16.mxu0 0
        %580 = vmatpush1.bf16.xpose.msra.mxu0 0
        %581 = vmatprep.subr.bf16.mxu0 0
        %582 = vmatpush1.bf16.xpose.msra.mxu0 0
        %583 = vmatprep.subr.bf16.mxu0 0
        %584 = vmatpush1.bf16.xpose.msra.mxu0 0
        %585 = vmatprep.subr.bf16.mxu0 0
        %586 = vmatpush1.bf16.xpose.msra.mxu0 0
        %587 = vmatprep.subr.bf16.mxu0 0
        %588 = vmatpush1.bf16.xpose.msra.mxu0 0
        %589 = vmatprep.subr.bf16.mxu0 0
        %590 = vmatpush1.bf16.xpose.msra.mxu0 0
        %591 = vmatprep.subr.bf16.mxu0 0
        %592 = vmatpush1.bf16.xpose.msra.mxu0 0
        %593 = vmatprep.subr.bf16.mxu0 0
        %594 = vmatpush1.bf16.xpose.msra.mxu0 0
        %595 = vmatprep.subr.bf16.mxu0 0
        %596 = vmatpush1.bf16.xpose.msra.mxu0 0
        %597 = vmatprep.subr.bf16.mxu0 0
        %598 = vmatpush1.bf16.xpose.msra.mxu0 0
        %599 = vmatprep.subr.bf16.mxu0 0
        %600 = vmatpush1.bf16.xpose.msra.mxu0 0
        %601 = vmatprep.mubr.bf16.mxu0 0
        %602 = vmatmul.mubr.bf16.gmra.mrb[0].mxu0 %v564
        %v603 = vpop.f32.mrb[0].mxu0
        %v604 = vadd.f32 0.0, %v603
        %v605 = vpop.f32.mrb[0].mxu0
        %v606 = vpop.f32.mrb[0].mxu0
        %v607 = vpop.f32.mrb[0].mxu0
        %608 = vdwg.mxu0
        %v609 = vsel %vm555, %v604, -inf
        %v610 = vsel %vm562, %v609, -inf
        %611 = vmax.xlane.f32.xlu0 %v610
        %v612 = vpop.xlane.xlu0 %611
        %v613 = vsub.f32 %v609, %v612
        %v614 = vmul.f32 %v613, 1.442695
        %v615 = vpow.pop %v614
        %v616 = vsel %vm562, %v615, 0.0
        %617 = vadd.xlane.f32.xlu0 %v616
        %v618 = vpop.xlane.xlu0 %617
        %v619 = vrcp.pop %v618
        %v620 = vmul.f32 %v615, %v619
        %v621 = vpack.c.bf16 %v620, %v620
        %622 = vrot.lane.b32.xlu0 %v558, 64
        %v623 = vpop.permute.xlu0 %622
        %v625 = vsel %vm562, %v621, 0
        %vm627 = vcmask 1043456
        %v629 = vsel %vm627, %v623, 0
        %631 = vmatprep.subr.bf16.mxu0 0
        %632 = vmatpush1.bf16.msra.mxu0 %v629
        %633 = vmatprep.subr.bf16.mxu0 0
        %634 = vmatpush1.bf16.msra.mxu0 0
        %635 = vmatprep.subr.bf16.mxu0 0
        %636 = vmatpush1.bf16.msra.mxu0 0
        %637 = vmatprep.subr.bf16.mxu0 0
        %638 = vmatpush1.bf16.msra.mxu0 0
        %639 = vmatprep.subr.bf16.mxu0 0
        %640 = vmatpush1.bf16.msra.mxu0 0
        %641 = vmatprep.subr.bf16.mxu0 0
        %642 = vmatpush1.bf16.msra.mxu0 0
        %643 = vmatprep.subr.bf16.mxu0 0
        %644 = vmatpush1.bf16.msra.mxu0 0
        %645 = vmatprep.subr.bf16.mxu0 0
        %646 = vmatpush1.bf16.msra.mxu0 0
        %647 = vmatprep.subr.bf16.mxu0 0
        %648 = vmatpush1.bf16.msra.mxu0 0
        %649 = vmatprep.subr.bf16.mxu0 0
        %650 = vmatpush1.bf16.msra.mxu0 0
        %651 = vmatprep.subr.bf16.mxu0 0
        %652 = vmatpush1.bf16.msra.mxu0 0
        %653 = vmatprep.subr.bf16.mxu0 0
        %654 = vmatpush1.bf16.msra.mxu0 0
        %655 = vmatprep.subr.bf16.mxu0 0
        %656 = vmatpush1.bf16.msra.mxu0 0
        %657 = vmatprep.subr.bf16.mxu0 0
        %658 = vmatpush1.bf16.msra.mxu0 0
        %659 = vmatprep.subr.bf16.mxu0 0
        %660 = vmatpush1.bf16.msra.mxu0 0
        %661 = vmatprep.subr.bf16.mxu0 0
        %662 = vmatpush1.bf16.msra.mxu0 0
        %663 = vmatprep.mubr.bf16.mxu0 0
        %664 = vmatmul.mubr.bf16.gmra.mrb[0].mxu0 %v625
        %v665 = vpop.f32.mrb[0].mxu0
        %v666 = vadd.f32 0.0, %v665
        %v667 = vpop.f32.mrb[0].mxu0
        %v668 = vpop.f32.mrb[0].mxu0
        %v669 = vpop.f32.mrb[0].mxu0
        %670 = vdwg.mxu0
        %671 = vst.msk [vmem:[#allocation2] sm:$0xff] %vm562, %v666
        %673 = vrot.lane.b32.xlu0 %v557, 120
        %v674 = vpop.permute.xlu0 %673
        %675 = vrot.lane.b32.xlu0 %v558, 88
        %v676 = vpop.permute.xlu0 %675
        %v678 = vsel %vm562, %v674, 0
        %v681 = vsel %vm562, %v676, 0
        %683 = vmatprep.subr.bf16.mxu0 0
        %684 = vmatpush1.bf16.xpose.msra.mxu0 %v681
        %685 = vmatprep.subr.bf16.mxu0 0
        %686 = vmatpush1.bf16.xpose.msra.mxu0 0
        %687 = vmatprep.subr.bf16.mxu0 0
        %688 = vmatpush1.bf16.xpose.msra.mxu0 0
        %689 = vmatprep.subr.bf16.mxu0 0
        %690 = vmatpush1.bf16.xpose.msra.mxu0 0
        %691 = vmatprep.subr.bf16.mxu0 0
        %692 = vmatpush1.bf16.xpose.msra.mxu0 0
        %693 = vmatprep.subr.bf16.mxu0 0
        %694 = vmatpush1.bf16.xpose.msra.mxu0 0
        %695 = vmatprep.subr.bf16.mxu0 0
        %696 = vmatpush1.bf16.xpose.msra.mxu0 0
        %697 = vmatprep.subr.bf16.mxu0 0
        %698 = vmatpush1.bf16.xpose.msra.mxu0 0
        %699 = vmatprep.subr.bf16.mxu0 0
        %700 = vmatpush1.bf16.xpose.msra.mxu0 0
        %701 = vmatprep.subr.bf16.mxu0 0
        %702 = vmatpush1.bf16.xpose.msra.mxu0 0
        %703 = vmatprep.subr.bf16.mxu0 0
        %704 = vmatpush1.bf16.xpose.msra.mxu0 0
        %705 = vmatprep.subr.bf16.mxu0 0
        %706 = vmatpush1.bf16.xpose.msra.mxu0 0
        %707 = vmatprep.subr.bf16.mxu0 0
        %708 = vmatpush1.bf16.xpose.msra.mxu0 0
        %709 = vmatprep.subr.bf16.mxu0 0
        %710 = vmatpush1.bf16.xpose.msra.mxu0 0
        %711 = vmatprep.subr.bf16.mxu0 0
        %712 = vmatpush1.bf16.xpose.msra.mxu0 0
        %713 = vmatprep.subr.bf16.mxu0 0
        %714 = vmatpush1.bf16.xpose.msra.mxu0 0
        %715 = vmatprep.mubr.bf16.mxu0 0
        %716 = vmatmul.mubr.bf16.gmra.mrb[0].mxu0 %v678
        %v717 = vpop.f32.mrb[0].mxu0
        %v718 = vadd.f32 0.0, %v717
        %v719 = vpop.f32.mrb[0].mxu0
        %v720 = vpop.f32.mrb[0].mxu0
        %v721 = vpop.f32.mrb[0].mxu0
        %722 = vdwg.mxu0
        %v723 = vsel %vm555, %v718, -inf
        %v724 = vsel %vm562, %v723, -inf
        %725 = vmax.xlane.f32.xlu0 %v724
        %v726 = vpop.xlane.xlu0 %725
        %v727 = vsub.f32 %v723, %v726
        %v728 = vmul.f32 %v727, 1.442695
        %v729 = vpow.pop %v728
        %v730 = vsel %vm562, %v729, 0.0
        %731 = vadd.xlane.f32.xlu0 %v730
        %v732 = vpop.xlane.xlu0 %731
        %v733 = vrcp.pop %v732
        %v734 = vmul.f32 %v729, %v733
        %v735 = vpack.c.bf16 %v734, %v734
        %736 = vrot.lane.b32.xlu0 %v558, 56
        %v737 = vpop.permute.xlu0 %736
        %v739 = vsel %vm562, %v735, 0
        %v742 = vsel %vm627, %v737, 0
        %744 = vmatprep.subr.bf16.mxu0 0
        %745 = vmatpush1.bf16.msra.mxu0 %v742
        %746 = vmatprep.subr.bf16.mxu0 0
        %747 = vmatpush1.bf16.msra.mxu0 0
        %748 = vmatprep.subr.bf16.mxu0 0
        %749 = vmatpush1.bf16.msra.mxu0 0
        %750 = vmatprep.subr.bf16.mxu0 0
        %751 = vmatpush1.bf16.msra.mxu0 0
        %752 = vmatprep.subr.bf16.mxu0 0
        %753 = vmatpush1.bf16.msra.mxu0 0
        %754 = vmatprep.subr.bf16.mxu0 0
        %755 = vmatpush1.bf16.msra.mxu0 0
        %756 = vmatprep.subr.bf16.mxu0 0
        %757 = vmatpush1.bf16.msra.mxu0 0
        %758 = vmatprep.subr.bf16.mxu0 0
        %759 = vmatpush1.bf16.msra.mxu0 0
        %760 = vmatprep.subr.bf16.mxu0 0
        %761 = vmatpush1.bf16.msra.mxu0 0
        %762 = vmatprep.subr.bf16.mxu0 0
        %763 = vmatpush1.bf16.msra.mxu0 0
        %764 = vmatprep.subr.bf16.mxu0 0
        %765 = vmatpush1.bf16.msra.mxu0 0
        %766 = vmatprep.subr.bf16.mxu0 0
        %767 = vmatpush1.bf16.msra.mxu0 0
        %768 = vmatprep.subr.bf16.mxu0 0
        %769 = vmatpush1.bf16.msra.mxu0 0
        %770 = vmatprep.subr.bf16.mxu0 0
        %771 = vmatpush1.bf16.msra.mxu0 0
        %772 = vmatprep.subr.bf16.mxu0 0
        %773 = vmatpush1.bf16.msra.mxu0 0
        %774 = vmatprep.subr.bf16.mxu0 0
        %775 = vmatpush1.bf16.msra.mxu0 0
        %776 = vmatprep.mubr.bf16.mxu0 0
        %777 = vmatmul.mubr.bf16.gmra.mrb[0].mxu0 %v739
        %v778 = vpop.f32.mrb[0].mxu0
        %v779 = vadd.f32 0.0, %v778
        %v780 = vpop.f32.mrb[0].mxu0
        %v781 = vpop.f32.mrb[0].mxu0
        %v782 = vpop.f32.mrb[0].mxu0
        %783 = vdwg.mxu0
        %785 = vrot.lane.b32.xlu0 %v779, 8
        %v786 = vpop.permute.xlu0 %785
        %vm788 = vcmask 130112
        %789 = vst.msk [vmem:[#allocation2] sm:$0xff] %vm788, %v786
        %790 = vrot.lane.b32.xlu0 %v557, 112
        %v791 = vpop.permute.xlu0 %790
        %792 = vrot.lane.b32.xlu0 %v558, 80
        %v793 = vpop.permute.xlu0 %792
        %v795 = vsel %vm562, %v791, 0
        %v798 = vsel %vm562, %v793, 0
        %800 = vmatprep.subr.bf16.mxu0 0
        %801 = vmatpush1.bf16.xpose.msra.mxu0 %v798
        %802 = vmatprep.subr.bf16.mxu0 0
        %803 = vmatpush1.bf16.xpose.msra.mxu0 0
        %804 = vmatprep.subr.bf16.mxu0 0
        %805 = vmatpush1.bf16.xpose.msra.mxu0 0
        %806 = vmatprep.subr.bf16.mxu0 0
        %807 = vmatpush1.bf16.xpose.msra.mxu0 0
        %808 = vmatprep.subr.bf16.mxu0 0
        %809 = vmatpush1.bf16.xpose.msra.mxu0 0
        %810 = vmatprep.subr.bf16.mxu0 0
        %811 = vmatpush1.bf16.xpose.msra.mxu0 0
        %812 = vmatprep.subr.bf16.mxu0 0
        %813 = vmatpush1.bf16.xpose.msra.mxu0 0
        %814 = vmatprep.subr.bf16.mxu0 0
        %815 = vmatpush1.bf16.xpose.msra.mxu0 0
        %816 = vmatprep.subr.bf16.mxu0 0
        %817 = vmatpush1.bf16.xpose.msra.mxu0 0
        %818 = vmatprep.subr.bf16.mxu0 0
        %819 = vmatpush1.bf16.xpose.msra.mxu0 0
        %820 = vmatprep.subr.bf16.mxu0 0
        %821 = vmatpush1.bf16.xpose.msra.mxu0 0
        %822 = vmatprep.subr.bf16.mxu0 0
        %823 = vmatpush1.bf16.xpose.msra.mxu0 0
        %824 = vmatprep.subr.bf16.mxu0 0
        %825 = vmatpush1.bf16.xpose.msra.mxu0 0
        %826 = vmatprep.subr.bf16.mxu0 0
        %827 = vmatpush1.bf16.xpose.msra.mxu0 0
        %828 = vmatprep.subr.bf16.mxu0 0
        %829 = vmatpush1.bf16.xpose.msra.mxu0 0
        %830 = vmatprep.subr.bf16.mxu0 0
        %831 = vmatpush1.bf16.xpose.msra.mxu0 0
        %832 = vmatprep.mubr.bf16.mxu0 0
        %833 = vmatmul.mubr.bf16.gmra.mrb[0].mxu0 %v795
        %v834 = vpop.f32.mrb[0].mxu0
        %v835 = vadd.f32 0.0, %v834
        %v836 = vpop.f32.mrb[0].mxu0
        %v837 = vpop.f32.mrb[0].mxu0
        %v838 = vpop.f32.mrb[0].mxu0
        %839 = vdwg.mxu0
        %v840 = vsel %vm555, %v835, -inf
        %v841 = vsel %vm562, %v840, -inf
        %842 = vmax.xlane.f32.xlu0 %v841
        %v843 = vpop.xlane.xlu0 %842
        %v844 = vsub.f32 %v840, %v843
        %v845 = vmul.f32 %v844, 1.442695
        %v846 = vpow.pop %v845
        %v847 = vsel %vm562, %v846, 0.0
        %848 = vadd.xlane.f32.xlu0 %v847
        %v849 = vpop.xlane.xlu0 %848
        %v850 = vrcp.pop %v849
        %v851 = vmul.f32 %v846, %v850
        %v852 = vpack.c.bf16 %v851, %v851
        %853 = vrot.lane.b32.xlu0 %v558, 48
        %v854 = vpop.permute.xlu0 %853
        %v856 = vsel %vm562, %v852, 0
        %v859 = vsel %vm627, %v854, 0
        %861 = vmatprep.subr.bf16.mxu0 0
        %862 = vmatpush1.bf16.msra.mxu0 %v859
        %863 = vmatprep.subr.bf16.mxu0 0
        %864 = vmatpush1.bf16.msra.mxu0 0
        %865 = vmatprep.subr.bf16.mxu0 0
        %866 = vmatpush1.bf16.msra.mxu0 0
        %867 = vmatprep.subr.bf16.mxu0 0
        %868 = vmatpush1.bf16.msra.mxu0 0
        %869 = vmatprep.subr.bf16.mxu0 0
        %870 = vmatpush1.bf16.msra.mxu0 0
        %871 = vmatprep.subr.bf16.mxu0 0
        %872 = vmatpush1.bf16.msra.mxu0 0
        %873 = vmatprep.subr.bf16.mxu0 0
        %874 = vmatpush1.bf16.msra.mxu0 0
        %875 = vmatprep.subr.bf16.mxu0 0
        %876 = vmatpush1.bf16.msra.mxu0 0
        %877 = vmatprep.subr.bf16.mxu0 0
        %878 = vmatpush1.bf16.msra.mxu0 0
        %879 = vmatprep.subr.bf16.mxu0 0
        %880 = vmatpush1.bf16.msra.mxu0 0
        %881 = vmatprep.subr.bf16.mxu0 0
        %882 = vmatpush1.bf16.msra.mxu0 0
        %883 = vmatprep.subr.bf16.mxu0 0
        %884 = vmatpush1.bf16.msra.mxu0 0
        %885 = vmatprep.subr.bf16.mxu0 0
        %886 = vmatpush1.bf16.msra.mxu0 0
        %887 = vmatprep.subr.bf16.mxu0 0
        %888 = vmatpush1.bf16.msra.mxu0 0
        %889 = vmatprep.subr.bf16.mxu0 0
        %890 = vmatpush1.bf16.msra.mxu0 0
        %891 = vmatprep.subr.bf16.mxu0 0
        %892 = vmatpush1.bf16.msra.mxu0 0
        %893 = vmatprep.mubr.bf16.mxu0 0
        %894 = vmatmul.mubr.bf16.gmra.mrb[0].mxu0 %v856
        %v895 = vpop.f32.mrb[0].mxu0
        %v896 = vadd.f32 0.0, %v895
        %v897 = vpop.f32.mrb[0].mxu0
        %v898 = vpop.f32.mrb[0].mxu0
        %v899 = vpop.f32.mrb[0].mxu0
        %900 = vdwg.mxu0
        %902 = vrot.lane.b32.xlu0 %v896, 16
        %v903 = vpop.permute.xlu0 %902
        %vm905 = vcmask 195712
        %906 = vst.msk [vmem:[#allocation2] sm:$0xff] %vm905, %v903
        %907 = vrot.lane.b32.xlu0 %v557, 104
        %v908 = vpop.permute.xlu0 %907
        %909 = vrot.lane.b32.xlu0 %v558, 72
        %v910 = vpop.permute.xlu0 %909
        %v912 = vsel %vm562, %v908, 0
        %v915 = vsel %vm562, %v910, 0
        %917 = vmatprep.subr.bf16.mxu0 0
        %918 = vmatpush1.bf16.xpose.msra.mxu0 %v915
        %919 = vmatprep.subr.bf16.mxu0 0
        %920 = vmatpush1.bf16.xpose.msra.mxu0 0
        %921 = vmatprep.subr.bf16.mxu0 0
        %922 = vmatpush1.bf16.xpose.msra.mxu0 0
        %923 = vmatprep.subr.bf16.mxu0 0
        %924 = vmatpush1.bf16.xpose.msra.mxu0 0
        %925 = vmatprep.subr.bf16.mxu0 0
        %926 = vmatpush1.bf16.xpose.msra.mxu0 0
        %927 = vmatprep.subr.bf16.mxu0 0
        %928 = vmatpush1.bf16.xpose.msra.mxu0 0
        %929 = vmatprep.subr.bf16.mxu0 0
        %930 = vmatpush1.bf16.xpose.msra.mxu0 0
        %931 = vmatprep.subr.bf16.mxu0 0
        %932 = vmatpush1.bf16.xpose.msra.mxu0 0
        %933 = vmatprep.subr.bf16.mxu0 0
        %934 = vmatpush1.bf16.xpose.msra.mxu0 0
        %935 = vmatprep.subr.bf16.mxu0 0
        %936 = vmatpush1.bf16.xpose.msra.mxu0 0
        %937 = vmatprep.subr.bf16.mxu0 0
        %938 = vmatpush1.bf16.xpose.msra.mxu0 0
        %939 = vmatprep.subr.bf16.mxu0 0
        %940 = vmatpush1.bf16.xpose.msra.mxu0 0
        %941 = vmatprep.subr.bf16.mxu0 0
        %942 = vmatpush1.bf16.xpose.msra.mxu0 0
        %943 = vmatprep.subr.bf16.mxu0 0
        %944 = vmatpush1.bf16.xpose.msra.mxu0 0
        %945 = vmatprep.subr.bf16.mxu0 0
        %946 = vmatpush1.bf16.xpose.msra.mxu0 0
        %947 = vmatprep.subr.bf16.mxu0 0
        %948 = vmatpush1.bf16.xpose.msra.mxu0 0
        %949 = vmatprep.mubr.bf16.mxu0 0
        %950 = vmatmul.mubr.bf16.gmra.mrb[0].mxu0 %v912
        %v951 = vpop.f32.mrb[0].mxu0
        %v952 = vadd.f32 0.0, %v951
        %v953 = vpop.f32.mrb[0].mxu0
        %v954 = vpop.f32.mrb[0].mxu0
        %v955 = vpop.f32.mrb[0].mxu0
        %956 = vdwg.mxu0
        %v957 = vsel %vm555, %v952, -inf
        %v958 = vsel %vm562, %v957, -inf
        %959 = vmax.xlane.f32.xlu0 %v958
        %v960 = vpop.xlane.xlu0 %959
        %v961 = vsub.f32 %v957, %v960
        %v962 = vmul.f32 %v961, 1.442695
        %v963 = vpow.pop %v962
        %v964 = vsel %vm562, %v963, 0.0
        %965 = vadd.xlane.f32.xlu0 %v964
        %v966 = vpop.xlane.xlu0 %965
        %v967 = vrcp.pop %v966
        %v968 = vmul.f32 %v963, %v967
        %v969 = vpack.c.bf16 %v968, %v968
        %970 = vrot.lane.b32.xlu0 %v558, 40
        %v971 = vpop.permute.xlu0 %970
        %v973 = vsel %vm562, %v969, 0
        %v976 = vsel %vm627, %v971, 0
        %978 = vmatprep.subr.bf16.mxu0 0
        %979 = vmatpush1.bf16.msra.mxu0 %v976
        %980 = vmatprep.subr.bf16.mxu0 0
        %981 = vmatpush1.bf16.msra.mxu0 0
        %982 = vmatprep.subr.bf16.mxu0 0
        %983 = vmatpush1.bf16.msra.mxu0 0
        %984 = vmatprep.subr.bf16.mxu0 0
        %985 = vmatpush1.bf16.msra.mxu0 0
        %986 = vmatprep.subr.bf16.mxu0 0
        %987 = vmatpush1.bf16.msra.mxu0 0
        %988 = vmatprep.subr.bf16.mxu0 0
        %989 = vmatpush1.bf16.msra.mxu0 0
        %990 = vmatprep.subr.bf16.mxu0 0
        %991 = vmatpush1.bf16.msra.mxu0 0
        %992 = vmatprep.subr.bf16.mxu0 0
        %993 = vmatpush1.bf16.msra.mxu0 0
        %994 = vmatprep.subr.bf16.mxu0 0
        %995 = vmatpush1.bf16.msra.mxu0 0
        %996 = vmatprep.subr.bf16.mxu0 0
        %997 = vmatpush1.bf16.msra.mxu0 0
        %998 = vmatprep.subr.bf16.mxu0 0
        %999 = vmatpush1.bf16.msra.mxu0 0
        %1000 = vmatprep.subr.bf16.mxu0 0
        %1001 = vmatpush1.bf16.msra.mxu0 0
        %1002 = vmatprep.subr.bf16.mxu0 0
        %1003 = vmatpush1.bf16.msra.mxu0 0
        %1004 = vmatprep.subr.bf16.mxu0 0
        %1005 = vmatpush1.bf16.msra.mxu0 0
        %1006 = vmatprep.subr.bf16.mxu0 0
        %1007 = vmatpush1.bf16.msra.mxu0 0
        %1008 = vmatprep.subr.bf16.mxu0 0
        %1009 = vmatpush1.bf16.msra.mxu0 0
        %1010 = vmatprep.mubr.bf16.mxu0 0
        %1011 = vmatmul.mubr.bf16.gmra.mrb[0].mxu0 %v973
        %v1012 = vpop.f32.mrb[0].mxu0
        %v1013 = vadd.f32 0.0, %v1012
        %v1014 = vpop.f32.mrb[0].mxu0
        %v1015 = vpop.f32.mrb[0].mxu0
        %v1016 = vpop.f32.mrb[0].mxu0
        %1017 = vdwg.mxu0
        %1019 = vrot.lane.b32.xlu0 %v1013, 24
        %v1020 = vpop.permute.xlu0 %1019
        %vm1022 = vcmask 261312
        %1023 = vst.msk [vmem:[#allocation2] sm:$0xff] %vm1022, %v1020
        %v1024 = vld [vmem:[#allocation2] sm:$0xff]
        %v1025 = vpack.c.bf16 %v1024, %v1024
        %v1026 = vld [vmem:[%s3] sm:$0xf]
        %v1027 = vld [vmem:[%s3 + $0x4] sm:$0xf]
        %v1028 = vld [vmem:[%s3 + $0x8] sm:$0xf]
        %v1029 = vld [vmem:[%s3 + $0xc] sm:$0xf]
        %v1030 = vld [vmem:[%s4] sm:$0x1]
        %v1032 = vlaneseq
        %v1033 = vshrl.u32 %v1032, 7
        %v1034 = vsub.s32 0, %v1033
        %v1035 = vrot.slane %v1030, %v1034
        %v1041 = vunpack.c.l.b16 %v1026
        %v1042 = vunpack.c.l.b16 %v1027
        %v1043 = vunpack.c.l.b16 %v1028
        %v1044 = vunpack.c.l.b16 %v1029
        %v1045 = vpack.c.b16 %v1042, %v1041
        %v1046 = vpack.c.b16 %v1044, %v1043
        %v1050 = vsel %vm455, %v1025, 0
        %1052 = vmatprep.subr.bf16.mxu0 0
        %1053 = vmatpush1.bf16.msra.mxu0 %v1045
        %1054 = vmatprep.subr.bf16.mxu0 0
        %1055 = vmatpush1.bf16.msra.mxu0 %v1046
        %1056 = vmatprep.subr.bf16.mxu0 0
        %1057 = vmatpush1.bf16.msra.mxu0 0
        %1058 = vmatprep.subr.bf16.mxu0 0
        %1059 = vmatpush1.bf16.msra.mxu0 0
        %1060 = vmatprep.subr.bf16.mxu0 0
        %1061 = vmatpush1.bf16.msra.mxu0 0
        %1062 = vmatprep.subr.bf16.mxu0 0
        %1063 = vmatpush1.bf16.msra.mxu0 0
        %1064 = vmatprep.subr.bf16.mxu0 0
        %1065 = vmatpush1.bf16.msra.mxu0 0
        %1066 = vmatprep.subr.bf16.mxu0 0
        %1067 = vmatpush1.bf16.msra.mxu0 0
        %1068 = vmatprep.subr.bf16.mxu0 0
        %1069 = vmatpush1.bf16.msra.mxu0 0
        %1070 = vmatprep.subr.bf16.mxu0 0
        %1071 = vmatpush1.bf16.msra.mxu0 0
        %1072 = vmatprep.subr.bf16.mxu0 0
        %1073 = vmatpush1.bf16.msra.mxu0 0
        %1074 = vmatprep.subr.bf16.mxu0 0
        %1075 = vmatpush1.bf16.msra.mxu0 0
        %1076 = vmatprep.subr.bf16.mxu0 0
        %1077 = vmatpush1.bf16.msra.mxu0 0
        %1078 = vmatprep.subr.bf16.mxu0 0
        %1079 = vmatpush1.bf16.msra.mxu0 0
        %1080 = vmatprep.subr.bf16.mxu0 0
        %1081 = vmatpush1.bf16.msra.mxu0 0
        %1082 = vmatprep.subr.bf16.mxu0 0
        %1083 = vmatpush1.bf16.msra.mxu0 0
        %1084 = vmatprep.mubr.bf16.mxu0 0
        %1085 = vmatmul.mubr.bf16.gmra.mrb[0].mxu0 %v1050
        %v1086 = vpop.f32.mrb[0].mxu0
        %v1087 = vadd.f32 %v1035, %v1086
        %v1088 = vpop.f32.mrb[0].mxu0
        %v1089 = vpop.f32.mrb[0].mxu0
        %v1090 = vpop.f32.mrb[0].mxu0
        %1091 = vdwg.mxu0
        %v1092 = vadd.f32 %v1087, %v452
        %v1093 = vld [vmem:[%s11] sm:$0x1]
        %v1094 = vld [vmem:[%s12] sm:$0x1]
        %v1095 = vsel %vm455, %v1092, 0.0
        %1096 = vadd.xlane.f32.xlu0 %v1095
        %v1097 = vpop.xlane.xlu0 %1096
        %v1098 = vmul.f32 %v1097, %v459
        %v1099 = vsub.f32 %v1092, %v1098
        %v1100 = vmul.f32 %v1099, %v1099
        %v1101 = vsel %vm455, %v1100, 0.0
        %1102 = vadd.xlane.f32.xlu0 %v1101
        %v1103 = vpop.xlane.xlu0 %1102
        %v1104 = vmul.f32 %v1103, %v459
        %v1105 = vadd.f32 %v1104, 1e-05
        %v1106 = vrsqrt.pop %v1105
        %v1107 = vmul.f32 %v1099, %v1106
        %v1109 = vlaneseq
        %v1110 = vshrl.u32 %v1109, 7
        %v1111 = vsub.s32 0, %v1110
        %v1112 = vrot.slane %v1093, %v1111
        %v1114 = vmul.f32 %v1107, %v1112
        %v1116 = vlaneseq
        %v1117 = vshrl.u32 %v1116, 7
        %v1118 = vsub.s32 0, %v1117
        %v1119 = vrot.slane %v1094, %v1118
        %v1121 = vadd.f32 %v1114, %v1119
        %v1122 = vpack.c.bf16 %v1121, %v1121
        %v1123 = vld [vmem:[#allocation3] sm:$0xf]
        %v1124 = vld [vmem:[#allocation3 + $0x4] sm:$0xf]
        %v1125 = vld [vmem:[#allocation3 + $0x8] sm:$0xf]
        %v1126 = vld [vmem:[#allocation3 + $0xc] sm:$0xf]
        %v1127 = vld [vmem:[%s6] sm:$0x1]
        %v1129 = vlaneseq
        %v1130 = vshrl.u32 %v1129, 7
        %v1131 = vsub.s32 0, %v1130
        %v1132 = vrot.slane %v1127, %v1131
        %v1138 = vunpack.c.l.b16 %v1123
        %v1139 = vunpack.c.l.b16 %v1124
        %v1140 = vunpack.c.l.b16 %v1125
        %v1141 = vunpack.c.l.b16 %v1126
        %v1142 = vpack.c.b16 %v1139, %v1138
        %v1143 = vpack.c.b16 %v1141, %v1140
        %v1147 = vsel %vm455, %v1122, 0
        %1149 = vmatprep.subr.bf16.mxu0 0
        %1150 = vmatpush1.bf16.msra.mxu0 %v1142
        %1151 = vmatprep.subr.bf16.mxu0 0
        %1152 = vmatpush1.bf16.msra.mxu0 %v1143
        %1153 = vmatprep.subr.bf16.mxu0 0
        %1154 = vmatpush1.bf16.msra.mxu0 0
        %1155 = vmatprep.subr.bf16.mxu0 0
        %1156 = vmatpush1.bf16.msra.mxu0 0
        %1157 = vmatprep.subr.bf16.mxu0 0
        %1158 = vmatpush1.bf16.msra.mxu0 0
        %1159 = vmatprep.subr.bf16.mxu0 0
        %1160 = vmatpush1.bf16.msra.mxu0 0
        %1161 = vmatprep.subr.bf16.mxu0 0
        %1162 = vmatpush1.bf16.msra.mxu0 0
        %1163 = vmatprep.subr.bf16.mxu0 0
        %1164 = vmatpush1.bf16.msra.mxu0 0
        %1165 = vmatprep.subr.bf16.mxu0 0
        %1166 = vmatpush1.bf16.msra.mxu0 0
        %1167 = vmatprep.subr.bf16.mxu0 0
        %1168 = vmatpush1.bf16.msra.mxu0 0
        %1169 = vmatprep.subr.bf16.mxu0 0
        %1170 = vmatpush1.bf16.msra.mxu0 0
        %1171 = vmatprep.subr.bf16.mxu0 0
        %1172 = vmatpush1.bf16.msra.mxu0 0
        %1173 = vmatprep.subr.bf16.mxu0 0
        %1174 = vmatpush1.bf16.msra.mxu0 0
        %1175 = vmatprep.subr.bf16.mxu0 0
        %1176 = vmatpush1.bf16.msra.mxu0 0
        %1177 = vmatprep.subr.bf16.mxu0 0
        %1178 = vmatpush1.bf16.msra.mxu0 0
        %1179 = vmatprep.subr.bf16.mxu0 0
        %1180 = vmatpush1.bf16.msra.mxu0 0
        %1181 = vmatprep.mubr.bf16.mxu0 0
        %1182 = vmatmul.mubr.bf16.gmra.mrb[0].mxu0 %v1147
        %v1183 = vpop.f32.mrb[0].mxu0
        %v1184 = vadd.f32 %v1132, %v1183
        %v1185 = vpop.f32.mrb[0].mxu0
        %v1186 = vpop.f32.mrb[0].mxu0
        %v1187 = vpop.f32.mrb[0].mxu0
        %1188 = vdwg.mxu0
        %v1189 = vmul.f32 %v1184, 0.5
        %v1190 = vmul.f32 %v1184, 0.044715
        %v1191 = vmul.f32 %v1190, %v1184
        %v1192 = vmul.f32 %v1191, %v1184
        %v1193 = vadd.f32 %v1184, %v1192
        %v1194 = vmul.f32 %v1193, 0.7978846
        %v1195 = vtanh.pop %v1194
        %v1196 = vadd.f32 %v1195, 1.0
        %v1197 = vmul.f32 %v1189, %v1196
        %v1198 = vpack.c.bf16 %v1197, %v1197
        %v1199 = vld [vmem:[%s7] sm:$0xf]
        %v1200 = vld [vmem:[%s7 + $0x4] sm:$0xf]
        %v1201 = vld [vmem:[%s7 + $0x8] sm:$0xf]
        %v1202 = vld [vmem:[%s7 + $0xc] sm:$0xf]
        %v1203 = vld [vmem:[%s7 + $0x10] sm:$0xf]
        %v1204 = vld [vmem:[%s7 + $0x14] sm:$0xf]
        %v1205 = vld [vmem:[%s7 + $0x18] sm:$0xf]
        %v1206 = vld [vmem:[%s7 + $0x1c] sm:$0xf]
        %v1207 = vld [vmem:[%s8] sm:$0x1]
        %v1209 = vlaneseq
        %v1210 = vshrl.u32 %v1209, 7
        %v1211 = vsub.s32 0, %v1210
        %v1212 = vrot.slane %v1207, %v1211
        %v1222 = vunpack.c.l.b16 %v1199
        %v1223 = vunpack.c.l.b16 %v1200
        %v1224 = vunpack.c.l.b16 %v1201
        %v1225 = vunpack.c.l.b16 %v1202
        %v1226 = vunpack.c.l.b16 %v1203
        %v1227 = vunpack.c.l.b16 %v1204
        %v1228 = vunpack.c.l.b16 %v1205
        %v1229 = vunpack.c.l.b16 %v1206
        %v1230 = vpack.c.b16 %v1223, %v1222
        %v1231 = vpack.c.b16 %v1225, %v1224
        %v1232 = vpack.c.b16 %v1227, %v1226
        %v1233 = vpack.c.b16 %v1229, %v1228
        %vm1238 = vcmask 523264
        %v1240 = vsel %vm1238, %v1198, 0
        %1242 = vmatprep.subr.bf16.mxu0 0
        %1243 = vmatpush1.bf16.msra.mxu0 %v1230
        %1244 = vmatprep.subr.bf16.mxu0 0
        %1245 = vmatpush1.bf16.msra.mxu0 %v1231
        %1246 = vmatprep.subr.bf16.mxu0 0
        %1247 = vmatpush1.bf16.msra.mxu0 %v1232
        %1248 = vmatprep.subr.bf16.mxu0 0
        %1249 = vmatpush1.bf16.msra.mxu0 %v1233
        %1250 = vmatprep.subr.bf16.mxu0 0
        %1251 = vmatpush1.bf16.msra.mxu0 0
        %1252 = vmatprep.subr.bf16.mxu0 0
        %1253 = vmatpush1.bf16.msra.mxu0 0
        %1254 = vmatprep.subr.bf16.mxu0 0
        %1255 = vmatpush1.bf16.msra.mxu0 0
        %1256 = vmatprep.subr.bf16.mxu0 0
        %1257 = vmatpush1.bf16.msra.mxu0 0
        %1258 = vmatprep.subr.bf16.mxu0 0
        %1259 = vmatpush1.bf16.msra.mxu0 0
        %1260 = vmatprep.subr.bf16.mxu0 0
        %1261 = vmatpush1.bf16.msra.mxu0 0
        %1262 = vmatprep.subr.bf16.mxu0 0
        %1263 = vmatpush1.bf16.msra.mxu0 0
        %1264 = vmatprep.subr.bf16.mxu0 0
        %1265 = vmatpush1.bf16.msra.mxu0 0
        %1266 = vmatprep.subr.bf16.mxu0 0
        %1267 = vmatpush1.bf16.msra.mxu0 0
        %1268 = vmatprep.subr.bf16.mxu0 0
        %1269 = vmatpush1.bf16.msra.mxu0 0
        %1270 = vmatprep.subr.bf16.mxu0 0
        %1271 = vmatpush1.bf16.msra.mxu0 0
        %1272 = vmatprep.subr.bf16.mxu0 0
        %1273 = vmatpush1.bf16.msra.mxu0 0
        %1274 = vmatprep.mubr.bf16.mxu0 0
        %1275 = vmatmul.mubr.bf16.gmra.mrb[0].mxu0 %v1240
        %v1276 = vpop.f32.mrb[0].mxu0
        %v1277 = vadd.f32 %v1212, %v1276
        %v1278 = vpop.f32.mrb[0].mxu0
        %v1279 = vpop.f32.mrb[0].mxu0
        %v1280 = vpop.f32.mrb[0].mxu0
        %1281 = vdwg.mxu0
        %v1282 = vadd.f32 %v1277, %v1092
        %1283 = vst.msk [vmem:[%s446] sm:$0xff] %vm455, %v1282
        %s1284 = sand.u32 %s314, 1
        %s1285 = scalar_lea.sflag [#allocation5], %s1284
        %s1286 = sand.u32 %s314, 1
        %s1287 = smul.addr %s1286, 8
        %s1288 = scalar_lea.vmem [#allocation6], %s1287
        // Predicated region
        $region77: #{tpu_custom_call.1} parent=71 // pred_check
          %p1289 = pneg %p324
        $region78: #{tpu_custom_call.1} parent=71 // pred_check_branch
          %1291 = sbr.rel (%p1289) target = $region80
        $region79: #{tpu_custom_call.1} parent=71 // pred_region
          %s1293 = ssub.s32 128, 128
          %1294 = vsyncadd %s1285, %s1293
          %s1295 = smul.addr %s28, 128
          %s1296 = scalar_lea.hbm %s13, %s1295
          %s1298 = sshll.u32 %s1288, 4
          %s1299 = int_to_ptr.vmem [resolvable:$true] %s1298
          %1301 = dma.vmem_to_hbm [thread:$0]  %s1299, 128, %s1296, %s1285
        $region80: #{tpu_custom_call.1} parent=71 // pred_fallthru
          _
      $region72: #{tpu_custom_call.1} parent=5 // pred_fallthru
        _
      %p1302 = scmp.le.s32.totalorder 2, %s23
      // Predicated region
      $region81: #{tpu_custom_call.1} parent=5 // pred_check
        %p1303 = pneg %p1302
      $region82: #{tpu_custom_call.1} parent=5 // pred_check_branch
        %1305 = sbr.rel (%p1303) target = $region84
      $region83: #{tpu_custom_call.1} parent=5 // pred_region
        %s1306 = ssub.s32 %s23, 2
        // Predicated region
        $region85: #{tpu_custom_call.1} parent=83 // pred_check
          %p1307 = pneg %p330
        $region86: #{tpu_custom_call.1} parent=83 // pred_check_branch
          %1309 = sbr.rel (%p1307) target = $region88
        $region87: #{tpu_custom_call.1} parent=83 // pred_region
          %s1310 = sand.u32 %s315, 1
          %s1311 = scalar_lea.sflag [#allocation5], %s1310
          %s1312 = sand.u32 %s315, 1
          %s1313 = smul.addr %s1312, 8
          %s1314 = scalar_lea.vmem [#allocation6], %s1313
          %1315 = dma.done %s1311, 128
        $region88: #{tpu_custom_call.1} parent=83 // pred_fallthru
          _
      $region84: #{tpu_custom_call.1} parent=5 // pred_fallthru
        _
    $region6: #{tpu_custom_call.1} parent=1 // loop_footer
      %s27 = sadd.s32 1, %s23
    $region7: #{tpu_custom_call.1} parent=1 // loop_footer_branch
      %22 = sbr.rel target = $region3
    $region8: #{tpu_custom_call.1} parent=1 // loop_exit
      _
    %1316 = vsyncpa [#allocation4], 1
    %s1317 = scalar_lea.sflag [#allocation4], 1
    %1318 = vsyncpa %s1317, 1
    %1319 = vsyncpa [#allocation5], 1
    %s1320 = scalar_lea.sflag [#allocation5], 1
    %1321 = vsyncpa %s1320, 1

</llo_original>
